<compile_context>
chip_gen: v5e
topology: v5e:2x2
jax: 0.10.0
libtpu: 0.0.40
codegen_flags: <defaults>
</compile_context>

<pallas_src>
import functools
import math

import jax
import jax.numpy as jnp
from jax.experimental import pallas as pl
from jax.experimental.pallas import tpu as pltpu


# ----------------------------- Kernel 1: GroupNorm + Mish -------------------

def _gn_mish_kernel(x_ref, gamma_ref, beta_ref, gmat_ref, o_ref):
    # x_ref:     (1, C, HW)   current sample
    # gamma_ref: (C, 1), beta_ref: (C, 1)
    # gmat_ref:  (C, C)  gmat[i, j] = 1/(Cg*HW) if chan i, j in same group else 0
    x = x_ref[0].astype(jnp.float32)                      # (C, HW)

    # Group statistics via MXU: row c of (gmat @ f) is the group-partial sum
    # for channel c's group, already scaled by 1/(Cg*HW).
    gsum = jnp.dot(gmat_ref[...], x, preferred_element_type=jnp.float32)
    gsq = jnp.dot(gmat_ref[...], x * x, preferred_element_type=jnp.float32)
    mean = jnp.sum(gsum, axis=1, keepdims=True)           # (C, 1) per-group mean
    meansq = jnp.sum(gsq, axis=1, keepdims=True)          # (C, 1) per-group E[x^2]
    var = meansq - mean * mean
    rstd = jax.lax.rsqrt(var + 1e-5)                      # PyTorch GroupNorm eps

    y = (x - mean) * rstd * gamma_ref[...] + beta_ref[...]

    # Mish: y * tanh(softplus(y)), softplus with PyTorch-style threshold 20.
    sp = jnp.where(y > 20.0, y, jnp.log(1.0 + jnp.exp(jnp.minimum(y, 20.0))))
    o_ref[0] = (y * jnp.tanh(sp)).astype(o_ref.dtype)


def groupnorm_mish(x, gamma, beta, num_groups=32):
    N, C, H, W = x.shape
    HW = H * W
    Cg = C // num_groups

    xf = x.reshape(N, C, HW)
    gidx = jnp.arange(C) // Cg
    gmat = (gidx[:, None] == gidx[None, :]).astype(jnp.float32) / float(Cg * HW)
    g2 = gamma.reshape(C, 1).astype(jnp.float32)
    b2 = beta.reshape(C, 1).astype(jnp.float32)

    out = pl.pallas_call(
        _gn_mish_kernel,
        out_shape=jax.ShapeDtypeStruct((N, C, HW), x.dtype),
        grid_spec=pltpu.PrefetchScalarGridSpec(
            num_scalar_prefetch=0,
            grid=(N,),
            in_specs=[
                pl.BlockSpec((1, C, HW), lambda n: (n, 0, 0)),
                pl.BlockSpec((C, 1), lambda n: (0, 0)),
                pl.BlockSpec((C, 1), lambda n: (0, 0)),
                pl.BlockSpec((C, C), lambda n: (0, 0)),
            ],
            out_specs=pl.BlockSpec((1, C, HW), lambda n: (n, 0, 0)),
        ),
        compiler_params=pltpu.CompilerParams(
            dimension_semantics=("parallel",)),
    )(xf, g2, b2, gmat)
    return out.reshape(N, C, H, W)


# ----------------------------- Kernel 2: 3x3 conv as one matmul -------------

def _conv_mm_kernel(p_ref, w_ref, b_ref, o_ref):
    # p_ref: (1, 9*Cin, Ho*Wo)   im2col patches for the current sample
    # w_ref: (Cout, 9*Cin)       pre-reshaped weight (VMEM resident)
    # b_ref: (Cout, 1)           bias
    y = jnp.dot(w_ref[...], p_ref[0].astype(jnp.float32),
                preferred_element_type=jnp.float32)        # (Cout, Ho*Wo)
    o_ref[0] = (y + b_ref[...]).astype(o_ref.dtype)


def conv3x3(h, w, b, stride=1):
    """h: (N, Cin, H, W); w: (Cout, Cin, 3, 3); b: (Cout,). padding=1."""
    N, C, H, W = h.shape
    C_out = w.shape[0]
    Ho = (H + 2 - 3) // stride + 1
    Wo = (W + 2 - 3) // stride + 1

    # --- glue: zero-pad + build 9 shifted (strided) taps = im2col ---
    hp = jnp.pad(h, ((0, 0), (0, 0), (1, 1), (1, 1)))
    taps = []
    for kh in range(3):
        for kw in range(3):
            taps.append(hp[:, :,
                           kh: kh + stride * (Ho - 1) + 1: stride,
                           kw: kw + stride * (Wo - 1) + 1: stride])
    patches = jnp.stack(taps, axis=1).reshape(N, 9 * C, Ho * Wo)

    # weight layout matches patches: index = (kh*3+kw)*Cin + c
    wmat = jnp.transpose(w, (0, 2, 3, 1)).reshape(C_out, 9 * C)
    b2 = b.reshape(C_out, 1).astype(jnp.float32)

    K = 9 * C
    out = pl.pallas_call(
        _conv_mm_kernel,
        out_shape=jax.ShapeDtypeStruct((N, C_out, Ho * Wo), h.dtype),
        grid_spec=pltpu.PrefetchScalarGridSpec(
            num_scalar_prefetch=0,
            grid=(N,),
            in_specs=[
                pl.BlockSpec((1, K, Ho * Wo), lambda n: (n, 0, 0)),
                pl.BlockSpec((C_out, K), lambda n: (0, 0)),
                pl.BlockSpec((C_out, 1), lambda n: (0, 0)),
            ],
            out_specs=pl.BlockSpec((1, C_out, Ho * Wo), lambda n: (n, 0, 0)),
        ),
        compiler_params=pltpu.CompilerParams(
            dimension_semantics=("parallel",)),
    )(patches, wmat, b2)
    return out.reshape(N, C_out, Ho, Wo)


# ----------------------------- ConvBlock forward -----------------------------

@functools.partial(jax.jit, static_argnames=("downsample",))
def conv_block_forward(x, gamma, beta, w, b, downsample=False):
    h = groupnorm_mish(x, gamma, beta, num_groups=32)
    # Dropout2d: identity in eval mode (forward-pass semantics).
    return conv3x3(h, w, b, stride=2 if downsample else 1)


# ----------------------------- pure-JAX reference ----------------------------

def _ref_conv_block(x, gamma, beta, w, b, downsample=False,
                    num_groups=32, eps=1e-5):
    N, C, H, W = x.shape
    Cg = C // num_groups
    xg = x.reshape(N, num_groups, Cg, H, W)
    mean = xg.mean(axis=(2, 3, 4), keepdims=True)
    var = xg.var(axis=(2, 3, 4), keepdims=True)
    xn = (xg - mean) / jnp.sqrt(var + eps)
    xn = xn.reshape(N, C, H, W) * gamma[None, :, None, None] \
        + beta[None, :, None, None]
    h = xn * jnp.tanh(jax.nn.softplus(xn))
    stride = 2 if downsample else 1
    y = jax.lax.conv_general_dilated(
        h, w, window_strides=(stride, stride), padding=((1, 1), (1, 1)),
        dimension_numbers=("NCHW", "OIHW", "NCHW"))
    return y + b[None, :, None, None]


if __name__ == "__main__":
    key = jax.random.PRNGKey(0)
    k1, k2, k3, k4, k5 = jax.random.split(key, 5)

    # GroupNorm(32, inDim) requires inDim % 32 == 0.
    N, Cin, Cout, H, W = 2, 64, 32, 16, 16
    x = jax.random.normal(k1, (N, Cin, H, W), dtype=jnp.float32)
    gamma = 1.0 + 0.1 * jax.random.normal(k2, (Cin,), dtype=jnp.float32)
    beta = 0.1 * jax.random.normal(k3, (Cin,), dtype=jnp.float32)
    w = jax.random.normal(k4, (Cout, Cin, 3, 3), dtype=jnp.float32) \
        / math.sqrt(Cin * 9)
    b = 0.1 * jax.random.normal(k5, (Cout,), dtype=jnp.float32)

    for downsample in (False, True):
        y = conv_block_forward(x, gamma, beta, w, b, downsample=downsample)
        y = jax.block_until_ready(y)
        y_ref = _ref_conv_block(x, gamma, beta, w, b, downsample=downsample)
        assert y.shape == y_ref.shape
        err = float(jnp.max(jnp.abs(y - y_ref)))
        assert err < 1e-3, f"max abs err {err} (downsample={downsample})"

    print("KERNEL_OK")
</pallas_src>

<mosaic_0001>
module attributes {stable_mosaic.version = 11 : i64} {
  func.func @_gn_mish_kernel(%arg0: i32, %arg1: memref<1x64x256xf32, #tpu.memory_space<vmem>>, %arg2: memref<64x1xf32, #tpu.memory_space<vmem>>, %arg3: memref<64x1xf32, #tpu.memory_space<vmem>>, %arg4: memref<64x64xf32, #tpu.memory_space<vmem>>, %arg5: memref<1x64x256xf32, #tpu.memory_space<vmem>>) attributes {dimension_semantics = [#tpu.dimension_semantics<parallel>], iteration_bounds = array<i64: 2>, scalar_prefetch = 0 : i64, scratch_operands = 0 : i64, tpu.core_type = #tpu.core_type<tc>, window_params = [{transform_indices = @transform_0, window_bounds = array<i64: 1, 64, 256>}, {pipeline_mode = #tpu.pipeline_mode<synchronous>, transform_indices = @transform_1, window_bounds = array<i64: 64, 1>}, {pipeline_mode = #tpu.pipeline_mode<synchronous>, transform_indices = @transform_2, window_bounds = array<i64: 64, 1>}, {pipeline_mode = #tpu.pipeline_mode<synchronous>, transform_indices = @transform_3, window_bounds = array<i64: 64, 64>}, {transform_indices = @transform_4, window_bounds = array<i64: 1, 64, 256>}]} {
    %c0 = arith.constant 0 : index
    %c0_0 = arith.constant 0 : index
    %c0_1 = arith.constant 0 : index
    %0 = vector.load %arg1[%c0, %c0_0, %c0_1] : memref<1x64x256xf32, #tpu.memory_space<vmem>>, vector<1x64x256xf32>
    %1 = vector.shape_cast %0 : vector<1x64x256xf32> to vector<64x256xf32>
    %c0_2 = arith.constant 0 : index
    %c0_3 = arith.constant 0 : index
    %2 = vector.load %arg4[%c0_2, %c0_3] : memref<64x64xf32, #tpu.memory_space<vmem>>, vector<64x64xf32>
    %cst = arith.constant dense<0.000000e+00> : vector<64x256xf32>
    %3 = tpu.matmul %2, %1, %cst {dimension_numbers = #tpu.dot_dimension_numbers<[1], [0], [0], [1], [0, 0, 1, 1], [], []>} : vector<64x64xf32>, vector<64x256xf32>, vector<64x256xf32> -> vector<64x256xf32>
    %c0_4 = arith.constant 0 : index
    %c0_5 = arith.constant 0 : index
    %4 = vector.load %arg4[%c0_4, %c0_5] : memref<64x64xf32, #tpu.memory_space<vmem>>, vector<64x64xf32>
    %5 = arith.mulf %1, %1 : vector<64x256xf32>
    %cst_6 = arith.constant dense<0.000000e+00> : vector<64x256xf32>
    %6 = tpu.matmul %4, %5, %cst_6 {dimension_numbers = #tpu.dot_dimension_numbers<[1], [0], [0], [1], [0, 0, 1, 1], [], []>} : vector<64x64xf32>, vector<64x256xf32>, vector<64x256xf32> -> vector<64x256xf32>
    %cst_7 = arith.constant dense<0.000000e+00> : vector<64xf32>
    %7 = vector.multi_reduction <add>, %3, %cst_7 [1] : vector<64x256xf32> to vector<64xf32>
    %8 = vector.shape_cast %7 : vector<64xf32> to vector<64x1xf32>
    %cst_8 = arith.constant dense<0.000000e+00> : vector<64xf32>
    %9 = vector.multi_reduction <add>, %6, %cst_8 [1] : vector<64x256xf32> to vector<64xf32>
    %10 = vector.shape_cast %9 : vector<64xf32> to vector<64x1xf32>
    %11 = arith.mulf %8, %8 : vector<64x1xf32>
    %12 = arith.subf %10, %11 : vector<64x1xf32>
    %cst_9 = arith.constant 9.99999974E-6 : f32
    %13 = vector.broadcast %cst_9 : f32 to vector<64x1xf32>
    %14 = arith.addf %12, %13 : vector<64x1xf32>
    %15 = math.rsqrt %14 : vector<64x1xf32>
    %16 = vector.broadcast %8 : vector<64x1xf32> to vector<64x256xf32>
    %17 = arith.subf %1, %16 : vector<64x256xf32>
    %18 = vector.broadcast %15 : vector<64x1xf32> to vector<64x256xf32>
    %19 = arith.mulf %17, %18 : vector<64x256xf32>
    %c0_10 = arith.constant 0 : index
    %c0_11 = arith.constant 0 : index
    %20 = vector.load %arg2[%c0_10, %c0_11] : memref<64x1xf32, #tpu.memory_space<vmem>>, vector<64x1xf32>
    %21 = vector.broadcast %20 : vector<64x1xf32> to vector<64x256xf32>
    %22 = arith.mulf %19, %21 : vector<64x256xf32>
    %c0_12 = arith.constant 0 : index
    %c0_13 = arith.constant 0 : index
    %23 = vector.load %arg3[%c0_12, %c0_13] : memref<64x1xf32, #tpu.memory_space<vmem>>, vector<64x1xf32>
    %24 = vector.broadcast %23 : vector<64x1xf32> to vector<64x256xf32>
    %25 = arith.addf %22, %24 : vector<64x256xf32>
    %cst_14 = arith.constant 2.000000e+01 : f32
    %26 = vector.broadcast %cst_14 : f32 to vector<64x256xf32>
    %27 = arith.cmpf ogt, %25, %26 : vector<64x256xf32>
    %cst_15 = arith.constant 2.000000e+01 : f32
    %28 = vector.broadcast %cst_15 : f32 to vector<64x256xf32>
    %29 = arith.minimumf %25, %28 : vector<64x256xf32>
    %30 = math.exp %29 : vector<64x256xf32>
    %cst_16 = arith.constant 1.000000e+00 : f32
    %31 = vector.broadcast %cst_16 : f32 to vector<64x256xf32>
    %32 = arith.addf %31, %30 : vector<64x256xf32>
    %33 = math.log %32 : vector<64x256xf32>
    %34 = arith.select %27, %25, %33 : vector<64x256xi1>, vector<64x256xf32>
    %35 = math.tanh %34 : vector<64x256xf32>
    %36 = arith.mulf %25, %35 : vector<64x256xf32>
    %c0_17 = arith.constant 0 : index
    %c0_18 = arith.constant 0 : index
    %c0_19 = arith.constant 0 : index
    %37 = vector.load %arg5[%c0_17, %c0_18, %c0_19] : memref<1x64x256xf32, #tpu.memory_space<vmem>>, vector<1x64x256xf32>
    %38 = vector.shape_cast %37 : vector<1x64x256xf32> to vector<64x256xf32>
    %39 = vector.shape_cast %36 : vector<64x256xf32> to vector<1x64x256xf32>
    tpu.vector_store %arg5[%c0_17, %c0_18, %c0_19], %39 {strides = array<i32>} : memref<1x64x256xf32, #tpu.memory_space<vmem>>, vector<1x64x256xf32>,
    return
  }
  func.func @transform_0(%arg0: i32) -> (i32, i32, i32) {
    %c0_i32 = arith.constant 0 : i32
    %c0_i32_0 = arith.constant 0 : i32
    %c0_i32_1 = arith.constant 0 : i32
    return %arg0, %c0_i32, %c0_i32_0 : i32, i32, i32
  }
  func.func @transform_1(%arg0: i32) -> (i32, i32) {
    %c0_i32 = arith.constant 0 : i32
    %c0_i32_0 = arith.constant 0 : i32
    %c0_i32_1 = arith.constant 0 : i32
    return %c0_i32, %c0_i32_0 : i32, i32
  }
  func.func @transform_2(%arg0: i32) -> (i32, i32) {
    %c0_i32 = arith.constant 0 : i32
    %c0_i32_0 = arith.constant 0 : i32
    %c0_i32_1 = arith.constant 0 : i32
    return %c0_i32, %c0_i32_0 : i32, i32
  }
  func.func @transform_3(%arg0: i32) -> (i32, i32) {
    %c0_i32 = arith.constant 0 : i32
    %c0_i32_0 = arith.constant 0 : i32
    %c0_i32_1 = arith.constant 0 : i32
    return %c0_i32, %c0_i32_0 : i32, i32
  }
  func.func @transform_4(%arg0: i32) -> (i32, i32, i32) {
    %c0_i32 = arith.constant 0 : i32
    %c0_i32_0 = arith.constant 0 : i32
    %c0_i32_1 = arith.constant 0 : i32
    return %arg0, %c0_i32, %c0_i32_0 : i32, i32, i32
  }
}

module attributes {stable_mosaic.version = 11 : i64} {
  func.func @_conv_mm_kernel(%arg0: i32, %arg1: memref<1x576x256xf32, #tpu.memory_space<vmem>>, %arg2: memref<32x576xf32, #tpu.memory_space<vmem>>, %arg3: memref<32x1xf32, #tpu.memory_space<vmem>>, %arg4: memref<1x32x256xf32, #tpu.memory_space<vmem>>) attributes {dimension_semantics = [#tpu.dimension_semantics<parallel>], iteration_bounds = array<i64: 2>, scalar_prefetch = 0 : i64, scratch_operands = 0 : i64, tpu.core_type = #tpu.core_type<tc>, window_params = [{transform_indices = @transform_0, window_bounds = array<i64: 1, 576, 256>}, {pipeline_mode = #tpu.pipeline_mode<synchronous>, transform_indices = @transform_1, window_bounds = array<i64: 32, 576>}, {pipeline_mode = #tpu.pipeline_mode<synchronous>, transform_indices = @transform_2, window_bounds = array<i64: 32, 1>}, {transform_indices = @transform_3, window_bounds = array<i64: 1, 32, 256>}]} {
    %c0 = arith.constant 0 : index
    %c0_0 = arith.constant 0 : index
    %0 = vector.load %arg2[%c0, %c0_0] : memref<32x576xf32, #tpu.memory_space<vmem>>, vector<32x576xf32>
    %c0_1 = arith.constant 0 : index
    %c0_2 = arith.constant 0 : index
    %c0_3 = arith.constant 0 : index
    %1 = vector.load %arg1[%c0_1, %c0_2, %c0_3] : memref<1x576x256xf32, #tpu.memory_space<vmem>>, vector<1x576x256xf32>
    %2 = vector.shape_cast %1 : vector<1x576x256xf32> to vector<576x256xf32>
    %cst = arith.constant dense<0.000000e+00> : vector<32x256xf32>
    %3 = tpu.matmul %0, %2, %cst {dimension_numbers = #tpu.dot_dimension_numbers<[1], [0], [0], [1], [0, 0, 1, 1], [], []>} : vector<32x576xf32>, vector<576x256xf32>, vector<32x256xf32> -> vector<32x256xf32>
    %c0_4 = arith.constant 0 : index
    %c0_5 = arith.constant 0 : index
    %4 = vector.load %arg3[%c0_4, %c0_5] : memref<32x1xf32, #tpu.memory_space<vmem>>, vector<32x1xf32>
    %5 = vector.broadcast %4 : vector<32x1xf32> to vector<32x256xf32>
    %6 = arith.addf %3, %5 : vector<32x256xf32>
    %c0_6 = arith.constant 0 : index
    %c0_7 = arith.constant 0 : index
    %c0_8 = arith.constant 0 : index
    %7 = vector.load %arg4[%c0_6, %c0_7, %c0_8] : memref<1x32x256xf32, #tpu.memory_space<vmem>>, vector<1x32x256xf32>
    %8 = vector.shape_cast %7 : vector<1x32x256xf32> to vector<32x256xf32>
    %9 = vector.shape_cast %6 : vector<32x256xf32> to vector<1x32x256xf32>
    tpu.vector_store %arg4[%c0_6, %c0_7, %c0_8], %9 {strides = array<i32>} : memref<1x32x256xf32, #tpu.memory_space<vmem>>, vector<1x32x256xf32>,
    return
  }
  func.func @transform_0(%arg0: i32) -> (i32, i32, i32) {
    %c0_i32 = arith.constant 0 : i32
    %c0_i32_0 = arith.constant 0 : i32
    %c0_i32_1 = arith.constant 0 : i32
    return %arg0, %c0_i32, %c0_i32_0 : i32, i32, i32
  }
  func.func @transform_1(%arg0: i32) -> (i32, i32) {
    %c0_i32 = arith.constant 0 : i32
    %c0_i32_0 = arith.constant 0 : i32
    %c0_i32_1 = arith.constant 0 : i32
    return %c0_i32, %c0_i32_0 : i32, i32
  }
  func.func @transform_2(%arg0: i32) -> (i32, i32) {
    %c0_i32 = arith.constant 0 : i32
    %c0_i32_0 = arith.constant 0 : i32
    %c0_i32_1 = arith.constant 0 : i32
    return %c0_i32, %c0_i32_0 : i32, i32
  }
  func.func @transform_3(%arg0: i32) -> (i32, i32, i32) {
    %c0_i32 = arith.constant 0 : i32
    %c0_i32_0 = arith.constant 0 : i32
    %c0_i32_1 = arith.constant 0 : i32
    return %arg0, %c0_i32, %c0_i32_0 : i32, i32, i32
  }
}

</mosaic_0001>

<llo_original>
// kernel: conv_block_forward.2
$region0: #{conv_block_forward.2}
  #allocation0 [shape = 'u32[]', space=smem, size = 0x4, offset = 0x4, fixed_abs, tag = 'smem constant byte address 0x4 - core index']
  #allocation1 [shape = 'u32[72,128]{1,0:T(1,128)}', space=vmem, size = 0x9000, scoped, tag = 'internal scratch']
  %s0 = inlined_call_operand.vmem [shape: f32[2,64,256], index: 0, kind: input, shape index: {}]
  %s1 = inlined_call_operand.vmem [shape: f32[64,1], index: 1, kind: input, shape index: {}]
  %s2 = inlined_call_operand.vmem [shape: f32[64,1], index: 2, kind: input, shape index: {}]
  %s3 = inlined_call_operand.vmem [shape: f32[64,64], index: 3, kind: input, shape index: {}]
  %s4 = inlined_call_operand.vmem [shape: f32[2,64,256], index: 4, kind: output, shape index: {}]
  %s5 = sld [smem:[#allocation0]]
  $region49: #{conv_block_forward.2} parent=0
    _
  %s7 = ssub.s32 1, %s5
  %s8 = scalar_select 0, %s7, %s5
  loop: start=0, step=1, limit=4
  $region2: #{conv_block_forward.2} parent=0 // loop_pre_header
    _
  $region3: #{conv_block_forward.2} parent=0 // loop_header
    %s10 = sphi 0, %s14
    %p11 = scmp.ge.s32.totalorder %s10, 4
    %s20 = sphi 0, %s22
    %s23 = sphi 0, %s20
    %s24 = sphi 0, %s23
    %s40 = sphi 0, %s24
    %s44 = sphi 0, %s44
    %s46 = sphi 0, %s44
    %s47 = sphi 0, %s46
    %s61 = sphi 0, %s47
    %s65 = sphi 0, %s65
    %s67 = sphi 0, %s65
    %s68 = sphi 0, %s67
    %s82 = sphi 0, %s68
    %s86 = sphi 0, %s86
    %s88 = sphi 0, %s86
    %s89 = sphi 0, %s88
    %s103 = sphi 0, %s89
    %s109 = sphi 0, %s111
    %s112 = sphi 0, %s109
    %s113 = sphi 0, %s112
    %s129 = sphi 0, %s113
  $region4: #{conv_block_forward.2} parent=0 // loop_header_branch
    %13 = sbr.rel (%p11) target = $region8
  $region5: #{conv_block_forward.2} parent=0 // loop_body
    %s15 = ssub.s32 %s10, 1
    %s16 = ssub.s32 %s10, 2
    %s17 = sadd.s32 %s10, 1
    %s18 = ssub.s32 %s10, %s17
    %p19 = scmp.eq.s32.totalorder %s18, 0
    %s21 = sadd.s32 %s20, 1
    %s22 = scalar_select %p19, %s20, %s21
    %p25 = pneg %p19
    %p26 = scmp.eq.s32.totalorder %s10, 1
    %p27 = por %p25, %p26
    %p28 = scmp.ne.s32.totalorder %s20, %s23
    %p29 = scmp.eq.s32.totalorder %s10, 0
    %p30 = por %p28, %p29
    %p31 = scmp.ne.s32.totalorder %s20, %s23
    %p32 = scmp.eq.s32.totalorder %s15, 1
    %p33 = por %p31, %p32
    %p34 = scmp.ne.s32.totalorder %s23, %s24
    %p35 = scmp.eq.s32.totalorder %s15, 0
    %p36 = por %p34, %p35
    %p37 = scmp.ne.s32.totalorder %s23, %s24
    %p38 = scmp.eq.s32.totalorder %s16, 1
    %p39 = por %p37, %p38
    %p41 = scmp.ne.s32.totalorder %s24, %s40
    %p42 = scmp.eq.s32.totalorder %s16, 0
    %p43 = por %p41, %p42
    %s45 = sadd.s32 %s44, 1
    %p48 = scmp.eq.s32.totalorder %s10, 1
    %p49 = scmp.ne.s32.totalorder %s44, %s46
    %p50 = scmp.eq.s32.totalorder %s10, 0
    %p51 = por %p49, %p50
    %p52 = scmp.ne.s32.totalorder %s44, %s46
    %p53 = scmp.eq.s32.totalorder %s15, 1
    %p54 = por %p52, %p53
    %p55 = scmp.ne.s32.totalorder %s46, %s47
    %p56 = scmp.eq.s32.totalorder %s15, 0
    %p57 = por %p55, %p56
    %p58 = scmp.ne.s32.totalorder %s46, %s47
    %p59 = scmp.eq.s32.totalorder %s16, 1
    %p60 = por %p58, %p59
    %p62 = scmp.ne.s32.totalorder %s47, %s61
    %p63 = scmp.eq.s32.totalorder %s16, 0
    %p64 = por %p62, %p63
    %s66 = sadd.s32 %s65, 1
    %p69 = scmp.eq.s32.totalorder %s10, 1
    %p70 = scmp.ne.s32.totalorder %s65, %s67
    %p71 = scmp.eq.s32.totalorder %s10, 0
    %p72 = por %p70, %p71
    %p73 = scmp.ne.s32.totalorder %s65, %s67
    %p74 = scmp.eq.s32.totalorder %s15, 1
    %p75 = por %p73, %p74
    %p76 = scmp.ne.s32.totalorder %s67, %s68
    %p77 = scmp.eq.s32.totalorder %s15, 0
    %p78 = por %p76, %p77
    %p79 = scmp.ne.s32.totalorder %s67, %s68
    %p80 = scmp.eq.s32.totalorder %s16, 1
    %p81 = por %p79, %p80
    %p83 = scmp.ne.s32.totalorder %s68, %s82
    %p84 = scmp.eq.s32.totalorder %s16, 0
    %p85 = por %p83, %p84
    %s87 = sadd.s32 %s86, 1
    %p90 = scmp.eq.s32.totalorder %s10, 1
    %p91 = scmp.ne.s32.totalorder %s86, %s88
    %p92 = scmp.eq.s32.totalorder %s10, 0
    %p93 = por %p91, %p92
    %p94 = scmp.ne.s32.totalorder %s86, %s88
    %p95 = scmp.eq.s32.totalorder %s15, 1
    %p96 = por %p94, %p95
    %p97 = scmp.ne.s32.totalorder %s88, %s89
    %p98 = scmp.eq.s32.totalorder %s15, 0
    %p99 = por %p97, %p98
    %p100 = scmp.ne.s32.totalorder %s88, %s89
    %p101 = scmp.eq.s32.totalorder %s16, 1
    %p102 = por %p100, %p101
    %p104 = scmp.ne.s32.totalorder %s89, %s103
    %p105 = scmp.eq.s32.totalorder %s16, 0
    %p106 = por %p104, %p105
    %s107 = ssub.s32 %s10, %s17
    %p108 = scmp.eq.s32.totalorder %s107, 0
    %s110 = sadd.s32 %s109, 1
    %s111 = scalar_select %p108, %s109, %s110
    %p114 = pneg %p108
    %p115 = scmp.eq.s32.totalorder %s10, 1
    %p116 = por %p114, %p115
    %p117 = scmp.ne.s32.totalorder %s109, %s112
    %p118 = scmp.eq.s32.totalorder %s10, 0
    %p119 = por %p117, %p118
    %p120 = scmp.ne.s32.totalorder %s109, %s112
    %p121 = scmp.eq.s32.totalorder %s15, 1
    %p122 = por %p120, %p121
    %p123 = scmp.ne.s32.totalorder %s112, %s113
    %p124 = scmp.eq.s32.totalorder %s15, 0
    %p125 = por %p123, %p124
    %p126 = scmp.ne.s32.totalorder %s112, %s113
    %p127 = scmp.eq.s32.totalorder %s16, 1
    %p128 = por %p126, %p127
    %p130 = scmp.ne.s32.totalorder %s113, %s129
    %p131 = scmp.eq.s32.totalorder %s16, 0
    %p132 = por %p130, %p131
    %p133 = scmp.le.s32.totalorder 1, %s10
    %p134 = scmp.lt.s32.totalorder %s10, 3
    %p135 = pnand %p133, %p134
    %p136 = pneg %p135
    // Predicated region
    $region9: #{conv_block_forward.2} parent=5 // pred_check
      _
    $region10: #{conv_block_forward.2} parent=5 // pred_check_branch
      %138 = sbr.rel (%p135) target = $region12
    $region11: #{conv_block_forward.2} parent=5 // pred_region
      %s139 = ssub.s32 %s10, 1
      // Predicated region
      $region13: #{conv_block_forward.2} parent=11 // pred_check
        %p140 = pneg %p57
      $region14: #{conv_block_forward.2} parent=11 // pred_check_branch
        %142 = sbr.rel (%p140) target = $region16
      $region15: #{conv_block_forward.2} parent=11 // pred_region
        _
      $region16: #{conv_block_forward.2} parent=11 // pred_fallthru
        _
      // Predicated region
      $region17: #{conv_block_forward.2} parent=11 // pred_check
        %p143 = pneg %p78
      $region18: #{conv_block_forward.2} parent=11 // pred_check_branch
        %145 = sbr.rel (%p143) target = $region20
      $region19: #{conv_block_forward.2} parent=11 // pred_region
        _
      $region20: #{conv_block_forward.2} parent=11 // pred_fallthru
        _
      // Predicated region
      $region21: #{conv_block_forward.2} parent=11 // pred_check
        %p146 = pneg %p99
      $region22: #{conv_block_forward.2} parent=11 // pred_check_branch
        %148 = sbr.rel (%p146) target = $region24
      $region23: #{conv_block_forward.2} parent=11 // pred_region
        _
      $region24: #{conv_block_forward.2} parent=11 // pred_fallthru
        _
    $region12: #{conv_block_forward.2} parent=5 // pred_fallthru
      _
    %p149 = scmp.lt.s32.totalorder %s10, 2
    // Predicated region
    $region25: #{conv_block_forward.2} parent=5 // pred_check
      %p150 = pneg %p149
    $region26: #{conv_block_forward.2} parent=5 // pred_check_branch
      %152 = sbr.rel (%p150) target = $region28
    $region27: #{conv_block_forward.2} parent=5 // pred_region
      // Predicated region
      $region29: #{conv_block_forward.2} parent=27 // pred_check
        %p153 = pneg %p30
      $region30: #{conv_block_forward.2} parent=27 // pred_check_branch
        %155 = sbr.rel (%p153) target = $region32
      $region31: #{conv_block_forward.2} parent=27 // pred_region
        %p156 = scmp.lt.s32.totalorder %s10, 1
        %s157 = scalar_select %p156, %s10, 1
        %s158 = smul.addr %s157, 16
        %s159 = smul.addr %s158, 8
        %s160 = scalar_lea.vmem %s0, %s159
      $region32: #{conv_block_forward.2} parent=27 // pred_fallthru
        _
    $region28: #{conv_block_forward.2} parent=5 // pred_fallthru
      _
    %p161 = scmp.le.s32.totalorder 1, %s10
    %p162 = scmp.lt.s32.totalorder %s10, 3
    %p163 = pnand %p161, %p162
    %p164 = pneg %p163
    // Predicated region
    $region33: #{conv_block_forward.2} parent=5 // pred_check
      _
    $region34: #{conv_block_forward.2} parent=5 // pred_check_branch
      %166 = sbr.rel (%p163) target = $region36
    $region35: #{conv_block_forward.2} parent=5 // pred_region
      %s167 = ssub.s32 %s10, 1
      %p168 = scmp.lt.s32.totalorder %s15, 1
      %s169 = scalar_select %p168, %s15, 1
      %s170 = smul.addr %s169, 16
      %s171 = smul.addr %s170, 8
      %s172 = scalar_lea.vmem %s0, %s171
      %p173 = pneg %p36
      %p174 = pneg %p33
      %p175 = pneg %p57
      %p176 = pneg %p54
      %p177 = pneg %p78
      %p178 = pneg %p75
      %p179 = pneg %p99
      %p180 = pneg %p96
      %p181 = pneg %p125
      %p182 = pneg %p122
      %p183 = scmp.lt.s32.totalorder %s15, 1
      %s184 = scalar_select %p183, %s15, 1
      %s185 = smul.addr %s184, 16
      %s186 = smul.addr %s185, 8
      %s187 = scalar_lea.vmem %s4, %s186
      %p188 = scmp.lt.s32.totalorder %s15, 1
      %s189 = scalar_select %p188, %s15, 1
      %s190 = smul.addr %s189, 16
      %s191 = smul.addr %s190, 8
      %s192 = scalar_lea.vmem %s0, %s191
      %p193 = scmp.lt.s32.totalorder %s15, 1
      %s194 = scalar_select %p193, %s15, 1
      %s195 = smul.addr %s194, 16
      %s196 = smul.addr %s195, 8
      %s197 = scalar_lea.vmem %s4, %s196
      %v198 = vld [vmem:[%s192] sm:$0xff]
      %v199 = vld [vmem:[%s192 + $0x8] sm:$0xff]
      %v200 = vld [vmem:[%s192 + $0x10] sm:$0xff]
      %v201 = vld [vmem:[%s192 + $0x18] sm:$0xff]
      %v202 = vld [vmem:[%s192 + $0x20] sm:$0xff]
      %v203 = vld [vmem:[%s192 + $0x28] sm:$0xff]
      %v204 = vld [vmem:[%s192 + $0x30] sm:$0xff]
      %v205 = vld [vmem:[%s192 + $0x38] sm:$0xff]
      %v206 = vld [vmem:[%s192 + $0x40] sm:$0xff]
      %v207 = vld [vmem:[%s192 + $0x48] sm:$0xff]
      %v208 = vld [vmem:[%s192 + $0x50] sm:$0xff]
      %v209 = vld [vmem:[%s192 + $0x58] sm:$0xff]
      %v210 = vld [vmem:[%s192 + $0x60] sm:$0xff]
      %v211 = vld [vmem:[%s192 + $0x68] sm:$0xff]
      %v212 = vld [vmem:[%s192 + $0x70] sm:$0xff]
      %v213 = vld [vmem:[%s192 + $0x78] sm:$0xff]
      %v214 = vld [vmem:[%s3] sm:$0xff]
      %v215 = vld [vmem:[%s3 + $0x8] sm:$0xff]
      %v216 = vld [vmem:[%s3 + $0x10] sm:$0xff]
      %v217 = vld [vmem:[%s3 + $0x18] sm:$0xff]
      %v218 = vld [vmem:[%s3 + $0x20] sm:$0xff]
      %v219 = vld [vmem:[%s3 + $0x28] sm:$0xff]
      %v220 = vld [vmem:[%s3 + $0x30] sm:$0xff]
      %v221 = vld [vmem:[%s3 + $0x38] sm:$0xff]
      %vm222 = vcmask 523264
      %v224 = vsel %vm222, %v214, 0
      %v227 = vsel %vm222, %v215, 0
      %v230 = vsel %vm222, %v216, 0
      %v233 = vsel %vm222, %v217, 0
      %v236 = vsel %vm222, %v218, 0
      %v239 = vsel %vm222, %v219, 0
      %v242 = vsel %vm222, %v220, 0
      %v245 = vsel %vm222, %v221, 0
      %247 = vmatpush.msra.mxu0 0.0
      %248 = vmatpush.msra.mxu0 0.0
      %249 = vmatpush.msra.mxu0 0.0
      %250 = vmatpush.msra.mxu0 0.0
      %251 = vmatpush.msra.mxu0 0.0
      %252 = vmatpush.msra.mxu0 0.0
      %253 = vmatpush.msra.mxu0 0.0
      %254 = vmatpush.msra.mxu0 0.0
      %255 = vmatpush.msra.mxu0 %v212
      %256 = vmatpush.msra.mxu0 %v210
      %257 = vmatpush.msra.mxu0 %v208
      %258 = vmatpush.msra.mxu0 %v206
      %259 = vmatpush.msra.mxu0 %v204
      %260 = vmatpush.msra.mxu0 %v202
      %261 = vmatpush.msra.mxu0 %v200
      %262 = vmatpush.msra.mxu0 %v198
      %263 = vmatmul.f32.gmra.mxu0 %v224
      %v264 = vpop.f32.mrf.mxu0
      %v265 = vadd.f32 0.0, %v264
      %266 = vmatmul.f32.gmra.mxu0 %v227
      %v267 = vpop.f32.mrf.mxu0
      %v268 = vadd.f32 0.0, %v267
      %269 = vmatmul.f32.gmra.mxu0 %v230
      %v270 = vpop.f32.mrf.mxu0
      %v271 = vadd.f32 0.0, %v270
      %272 = vmatmul.f32.gmra.mxu0 %v233
      %v273 = vpop.f32.mrf.mxu0
      %v274 = vadd.f32 0.0, %v273
      %275 = vmatmul.f32.gmra.mxu0 %v236
      %v276 = vpop.f32.mrf.mxu0
      %v277 = vadd.f32 0.0, %v276
      %278 = vmatmul.f32.gmra.mxu0 %v239
      %v279 = vpop.f32.mrf.mxu0
      %v280 = vadd.f32 0.0, %v279
      %281 = vmatmul.f32.gmra.mxu0 %v242
      %v282 = vpop.f32.mrf.mxu0
      %v283 = vadd.f32 0.0, %v282
      %284 = vmatmul.f32.gmra.mxu0 %v245
      %v285 = vpop.f32.mrf.mxu0
      %v286 = vadd.f32 0.0, %v285
      %287 = vdwg.mxu0
      %288 = vmatpush.msra.mxu0 0.0
      %289 = vmatpush.msra.mxu0 0.0
      %290 = vmatpush.msra.mxu0 0.0
      %291 = vmatpush.msra.mxu0 0.0
      %292 = vmatpush.msra.mxu0 0.0
      %293 = vmatpush.msra.mxu0 0.0
      %294 = vmatpush.msra.mxu0 0.0
      %295 = vmatpush.msra.mxu0 0.0
      %296 = vmatpush.msra.mxu0 %v213
      %297 = vmatpush.msra.mxu0 %v211
      %298 = vmatpush.msra.mxu0 %v209
      %299 = vmatpush.msra.mxu0 %v207
      %300 = vmatpush.msra.mxu0 %v205
      %301 = vmatpush.msra.mxu0 %v203
      %302 = vmatpush.msra.mxu0 %v201
      %303 = vmatpush.msra.mxu0 %v199
      %304 = vmatmul.f32.gmra.mxu0 %v224
      %v305 = vpop.f32.mrf.mxu0
      %v306 = vadd.f32 0.0, %v305
      %307 = vmatmul.f32.gmra.mxu0 %v227
      %v308 = vpop.f32.mrf.mxu0
      %v309 = vadd.f32 0.0, %v308
      %310 = vmatmul.f32.gmra.mxu0 %v230
      %v311 = vpop.f32.mrf.mxu0
      %v312 = vadd.f32 0.0, %v311
      %313 = vmatmul.f32.gmra.mxu0 %v233
      %v314 = vpop.f32.mrf.mxu0
      %v315 = vadd.f32 0.0, %v314
      %316 = vmatmul.f32.gmra.mxu0 %v236
      %v317 = vpop.f32.mrf.mxu0
      %v318 = vadd.f32 0.0, %v317
      %319 = vmatmul.f32.gmra.mxu0 %v239
      %v320 = vpop.f32.mrf.mxu0
      %v321 = vadd.f32 0.0, %v320
      %322 = vmatmul.f32.gmra.mxu0 %v242
      %v323 = vpop.f32.mrf.mxu0
      %v324 = vadd.f32 0.0, %v323
      %325 = vmatmul.f32.gmra.mxu0 %v245
      %v326 = vpop.f32.mrf.mxu0
      %v327 = vadd.f32 0.0, %v326
      %328 = vdwg.mxu0
      %v329 = vmul.f32 %v198, %v198
      %v330 = vmul.f32 %v199, %v199
      %v331 = vmul.f32 %v200, %v200
      %v332 = vmul.f32 %v201, %v201
      %v333 = vmul.f32 %v202, %v202
      %v334 = vmul.f32 %v203, %v203
      %v335 = vmul.f32 %v204, %v204
      %v336 = vmul.f32 %v205, %v205
      %v337 = vmul.f32 %v206, %v206
      %v338 = vmul.f32 %v207, %v207
      %v339 = vmul.f32 %v208, %v208
      %v340 = vmul.f32 %v209, %v209
      %v341 = vmul.f32 %v210, %v210
      %v342 = vmul.f32 %v211, %v211
      %v343 = vmul.f32 %v212, %v212
      %v344 = vmul.f32 %v213, %v213
      %345 = vmatpush.msra.mxu0 0.0
      %346 = vmatpush.msra.mxu0 0.0
      %347 = vmatpush.msra.mxu0 0.0
      %348 = vmatpush.msra.mxu0 0.0
      %349 = vmatpush.msra.mxu0 0.0
      %350 = vmatpush.msra.mxu0 0.0
      %351 = vmatpush.msra.mxu0 0.0
      %352 = vmatpush.msra.mxu0 0.0
      %353 = vmatpush.msra.mxu0 %v343
      %354 = vmatpush.msra.mxu0 %v341
      %355 = vmatpush.msra.mxu0 %v339
      %356 = vmatpush.msra.mxu0 %v337
      %357 = vmatpush.msra.mxu0 %v335
      %358 = vmatpush.msra.mxu0 %v333
      %359 = vmatpush.msra.mxu0 %v331
      %360 = vmatpush.msra.mxu0 %v329
      %361 = vmatmul.f32.gmra.mxu0 %v224
      %v362 = vpop.f32.mrf.mxu0
      %v363 = vadd.f32 0.0, %v362
      %364 = vmatmul.f32.gmra.mxu0 %v227
      %v365 = vpop.f32.mrf.mxu0
      %v366 = vadd.f32 0.0, %v365
      %367 = vmatmul.f32.gmra.mxu0 %v230
      %v368 = vpop.f32.mrf.mxu0
      %v369 = vadd.f32 0.0, %v368
      %370 = vmatmul.f32.gmra.mxu0 %v233
      %v371 = vpop.f32.mrf.mxu0
      %v372 = vadd.f32 0.0, %v371
      %373 = vmatmul.f32.gmra.mxu0 %v236
      %v374 = vpop.f32.mrf.mxu0
      %v375 = vadd.f32 0.0, %v374
      %376 = vmatmul.f32.gmra.mxu0 %v239
      %v377 = vpop.f32.mrf.mxu0
      %v378 = vadd.f32 0.0, %v377
      %379 = vmatmul.f32.gmra.mxu0 %v242
      %v380 = vpop.f32.mrf.mxu0
      %v381 = vadd.f32 0.0, %v380
      %382 = vmatmul.f32.gmra.mxu0 %v245
      %v383 = vpop.f32.mrf.mxu0
      %v384 = vadd.f32 0.0, %v383
      %385 = vdwg.mxu0
      %386 = vmatpush.msra.mxu0 0.0
      %387 = vmatpush.msra.mxu0 0.0
      %388 = vmatpush.msra.mxu0 0.0
      %389 = vmatpush.msra.mxu0 0.0
      %390 = vmatpush.msra.mxu0 0.0
      %391 = vmatpush.msra.mxu0 0.0
      %392 = vmatpush.msra.mxu0 0.0
      %393 = vmatpush.msra.mxu0 0.0
      %394 = vmatpush.msra.mxu0 %v344
      %395 = vmatpush.msra.mxu0 %v342
      %396 = vmatpush.msra.mxu0 %v340
      %397 = vmatpush.msra.mxu0 %v338
      %398 = vmatpush.msra.mxu0 %v336
      %399 = vmatpush.msra.mxu0 %v334
      %400 = vmatpush.msra.mxu0 %v332
      %401 = vmatpush.msra.mxu0 %v330
      %402 = vmatmul.f32.gmra.mxu0 %v224
      %v403 = vpop.f32.mrf.mxu0
      %v404 = vadd.f32 0.0, %v403
      %405 = vmatmul.f32.gmra.mxu0 %v227
      %v406 = vpop.f32.mrf.mxu0
      %v407 = vadd.f32 0.0, %v406
      %408 = vmatmul.f32.gmra.mxu0 %v230
      %v409 = vpop.f32.mrf.mxu0
      %v410 = vadd.f32 0.0, %v409
      %411 = vmatmul.f32.gmra.mxu0 %v233
      %v412 = vpop.f32.mrf.mxu0
      %v413 = vadd.f32 0.0, %v412
      %414 = vmatmul.f32.gmra.mxu0 %v236
      %v415 = vpop.f32.mrf.mxu0
      %v416 = vadd.f32 0.0, %v415
      %417 = vmatmul.f32.gmra.mxu0 %v239
      %v418 = vpop.f32.mrf.mxu0
      %v419 = vadd.f32 0.0, %v418
      %420 = vmatmul.f32.gmra.mxu0 %v242
      %v421 = vpop.f32.mrf.mxu0
      %v422 = vadd.f32 0.0, %v421
      %423 = vmatmul.f32.gmra.mxu0 %v245
      %v424 = vpop.f32.mrf.mxu0
      %v425 = vadd.f32 0.0, %v424
      %426 = vdwg.mxu0
      %v427 = vadd.f32 %v265, %v306
      %428 = vadd.xlane.f32.xlu0 %v427
      %v429 = vpop.xlane.xlu0 %428
      %v430 = vadd.f32 %v268, %v309
      %431 = vadd.xlane.f32.xlu0 %v430
      %v432 = vpop.xlane.xlu0 %431
      %v433 = vadd.f32 %v271, %v312
      %434 = vadd.xlane.f32.xlu0 %v433
      %v435 = vpop.xlane.xlu0 %434
      %v436 = vadd.f32 %v274, %v315
      %437 = vadd.xlane.f32.xlu0 %v436
      %v438 = vpop.xlane.xlu0 %437
      %v439 = vadd.f32 %v277, %v318
      %440 = vadd.xlane.f32.xlu0 %v439
      %v441 = vpop.xlane.xlu0 %440
      %v442 = vadd.f32 %v280, %v321
      %443 = vadd.xlane.f32.xlu0 %v442
      %v444 = vpop.xlane.xlu0 %443
      %v445 = vadd.f32 %v283, %v324
      %446 = vadd.xlane.f32.xlu0 %v445
      %v447 = vpop.xlane.xlu0 %446
      %v448 = vadd.f32 %v286, %v327
      %449 = vadd.xlane.f32.xlu0 %v448
      %v450 = vpop.xlane.xlu0 %449
      %v451 = vadd.f32 %v363, %v404
      %452 = vadd.xlane.f32.xlu0 %v451
      %v453 = vpop.xlane.xlu0 %452
      %v454 = vadd.f32 %v366, %v407
      %455 = vadd.xlane.f32.xlu0 %v454
      %v456 = vpop.xlane.xlu0 %455
      %v457 = vadd.f32 %v369, %v410
      %458 = vadd.xlane.f32.xlu0 %v457
      %v459 = vpop.xlane.xlu0 %458
      %v460 = vadd.f32 %v372, %v413
      %461 = vadd.xlane.f32.xlu0 %v460
      %v462 = vpop.xlane.xlu0 %461
      %v463 = vadd.f32 %v375, %v416
      %464 = vadd.xlane.f32.xlu0 %v463
      %v465 = vpop.xlane.xlu0 %464
      %v466 = vadd.f32 %v378, %v419
      %467 = vadd.xlane.f32.xlu0 %v466
      %v468 = vpop.xlane.xlu0 %467
      %v469 = vadd.f32 %v381, %v422
      %470 = vadd.xlane.f32.xlu0 %v469
      %v471 = vpop.xlane.xlu0 %470
      %v472 = vadd.f32 %v384, %v425
      %473 = vadd.xlane.f32.xlu0 %v472
      %v474 = vpop.xlane.xlu0 %473
      %v475 = vmul.f32 %v429, %v429
      %v476 = vmul.f32 %v432, %v432
      %v477 = vmul.f32 %v435, %v435
      %v478 = vmul.f32 %v438, %v438
      %v479 = vmul.f32 %v441, %v441
      %v480 = vmul.f32 %v444, %v444
      %v481 = vmul.f32 %v447, %v447
      %v482 = vmul.f32 %v450, %v450
      %v483 = vsub.f32 %v453, %v475
      %v484 = vsub.f32 %v456, %v476
      %v485 = vsub.f32 %v459, %v477
      %v486 = vsub.f32 %v462, %v478
      %v487 = vsub.f32 %v465, %v479
      %v488 = vsub.f32 %v468, %v480
      %v489 = vsub.f32 %v471, %v481
      %v490 = vsub.f32 %v474, %v482
      %v491 = vadd.f32 %v483, 1e-05
      %v492 = vadd.f32 %v484, 1e-05
      %v493 = vadd.f32 %v485, 1e-05
      %v494 = vadd.f32 %v486, 1e-05
      %v495 = vadd.f32 %v487, 1e-05
      %v496 = vadd.f32 %v488, 1e-05
      %v497 = vadd.f32 %v489, 1e-05
      %v498 = vadd.f32 %v490, 1e-05
      %v499 = vrsqrt.pop %v491
      %v500 = vmul.f32 %v499, %v491
      %v501 = vmul.f32 %v500, %v499
      %v502 = vmul.f32 0.5, %v501
      %v503 = vsub.f32 1.5, %v502
      %v504 = vmul.f32 %v499, %v503
      %vm505 = vweird.f32 %v491
      %vm506 = vweird.f32 %v499
      %vm507 = vmor %vm505, %vm506
      %v508 = vsel %vm507, %v499, %v504
      %v509 = vrsqrt.pop %v492
      %v510 = vmul.f32 %v509, %v492
      %v511 = vmul.f32 %v510, %v509
      %v512 = vmul.f32 0.5, %v511
      %v513 = vsub.f32 1.5, %v512
      %v514 = vmul.f32 %v509, %v513
      %vm515 = vweird.f32 %v492
      %vm516 = vweird.f32 %v509
      %vm517 = vmor %vm515, %vm516
      %v518 = vsel %vm517, %v509, %v514
      %v519 = vrsqrt.pop %v493
      %v520 = vmul.f32 %v519, %v493
      %v521 = vmul.f32 %v520, %v519
      %v522 = vmul.f32 0.5, %v521
      %v523 = vsub.f32 1.5, %v522
      %v524 = vmul.f32 %v519, %v523
      %vm525 = vweird.f32 %v493
      %vm526 = vweird.f32 %v519
      %vm527 = vmor %vm525, %vm526
      %v528 = vsel %vm527, %v519, %v524
      %v529 = vrsqrt.pop %v494
      %v530 = vmul.f32 %v529, %v494
      %v531 = vmul.f32 %v530, %v529
      %v532 = vmul.f32 0.5, %v531
      %v533 = vsub.f32 1.5, %v532
      %v534 = vmul.f32 %v529, %v533
      %vm535 = vweird.f32 %v494
      %vm536 = vweird.f32 %v529
      %vm537 = vmor %vm535, %vm536
      %v538 = vsel %vm537, %v529, %v534
      %v539 = vrsqrt.pop %v495
      %v540 = vmul.f32 %v539, %v495
      %v541 = vmul.f32 %v540, %v539
      %v542 = vmul.f32 0.5, %v541
      %v543 = vsub.f32 1.5, %v542
      %v544 = vmul.f32 %v539, %v543
      %vm545 = vweird.f32 %v495
      %vm546 = vweird.f32 %v539
      %vm547 = vmor %vm545, %vm546
      %v548 = vsel %vm547, %v539, %v544
      %v549 = vrsqrt.pop %v496
      %v550 = vmul.f32 %v549, %v496
      %v551 = vmul.f32 %v550, %v549
      %v552 = vmul.f32 0.5, %v551
      %v553 = vsub.f32 1.5, %v552
      %v554 = vmul.f32 %v549, %v553
      %vm555 = vweird.f32 %v496
      %vm556 = vweird.f32 %v549
      %vm557 = vmor %vm555, %vm556
      %v558 = vsel %vm557, %v549, %v554
      %v559 = vrsqrt.pop %v497
      %v560 = vmul.f32 %v559, %v497
      %v561 = vmul.f32 %v560, %v559
      %v562 = vmul.f32 0.5, %v561
      %v563 = vsub.f32 1.5, %v562
      %v564 = vmul.f32 %v559, %v563
      %vm565 = vweird.f32 %v497
      %vm566 = vweird.f32 %v559
      %vm567 = vmor %vm565, %vm566
      %v568 = vsel %vm567, %v559, %v564
      %v569 = vrsqrt.pop %v498
      %v570 = vmul.f32 %v569, %v498
      %v571 = vmul.f32 %v570, %v569
      %v572 = vmul.f32 0.5, %v571
      %v573 = vsub.f32 1.5, %v572
      %v574 = vmul.f32 %v569, %v573
      %vm575 = vweird.f32 %v498
      %vm576 = vweird.f32 %v569
      %vm577 = vmor %vm575, %vm576
      %v578 = vsel %vm577, %v569, %v574
      %v579 = vsub.f32 %v198, %v429
      %v580 = vsub.f32 %v199, %v429
      %v581 = vsub.f32 %v200, %v432
      %v582 = vsub.f32 %v201, %v432
      %v583 = vsub.f32 %v202, %v435
      %v584 = vsub.f32 %v203, %v435
      %v585 = vsub.f32 %v204, %v438
      %v586 = vsub.f32 %v205, %v438
      %v587 = vsub.f32 %v206, %v441
      %v588 = vsub.f32 %v207, %v441
      %v589 = vsub.f32 %v208, %v444
      %v590 = vsub.f32 %v209, %v444
      %v591 = vsub.f32 %v210, %v447
      %v592 = vsub.f32 %v211, %v447
      %v593 = vsub.f32 %v212, %v450
      %v594 = vsub.f32 %v213, %v450
      %v595 = vmul.f32 %v579, %v508
      %v596 = vmul.f32 %v580, %v508
      %v597 = vmul.f32 %v581, %v518
      %v598 = vmul.f32 %v582, %v518
      %v599 = vmul.f32 %v583, %v528
      %v600 = vmul.f32 %v584, %v528
      %v601 = vmul.f32 %v585, %v538
      %v602 = vmul.f32 %v586, %v538
      %v603 = vmul.f32 %v587, %v548
      %v604 = vmul.f32 %v588, %v548
      %v605 = vmul.f32 %v589, %v558
      %v606 = vmul.f32 %v590, %v558
      %v607 = vmul.f32 %v591, %v568
      %v608 = vmul.f32 %v592, %v568
      %v609 = vmul.f32 %v593, %v578
      %v610 = vmul.f32 %v594, %v578
      %v611 = vld [vmem:[%s1] sm:$0xff]
      %v612 = vld [vmem:[%s1 + $0x8] sm:$0xff]
      %v613 = vld [vmem:[%s1 + $0x10] sm:$0xff]
      %v614 = vld [vmem:[%s1 + $0x18] sm:$0xff]
      %v615 = vld [vmem:[%s1 + $0x20] sm:$0xff]
      %v616 = vld [vmem:[%s1 + $0x28] sm:$0xff]
      %v617 = vld [vmem:[%s1 + $0x30] sm:$0xff]
      %v618 = vld [vmem:[%s1 + $0x38] sm:$0xff]
      %620 = vset.pattern.permute.xlu0 0
      %621 = vperm.xlu0 %620, %v611
      %v622 = vpop.permute.xlu0 %621
      %625 = vset.pattern.permute.xlu0 0
      %626 = vperm.xlu0 %625, %v612
      %v627 = vpop.permute.xlu0 %626
      %630 = vset.pattern.permute.xlu0 0
      %631 = vperm.xlu0 %630, %v613
      %v632 = vpop.permute.xlu0 %631
      %635 = vset.pattern.permute.xlu0 0
      %636 = vperm.xlu0 %635, %v614
      %v637 = vpop.permute.xlu0 %636
      %640 = vset.pattern.permute.xlu0 0
      %641 = vperm.xlu0 %640, %v615
      %v642 = vpop.permute.xlu0 %641
      %645 = vset.pattern.permute.xlu0 0
      %646 = vperm.xlu0 %645, %v616
      %v647 = vpop.permute.xlu0 %646
      %650 = vset.pattern.permute.xlu0 0
      %651 = vperm.xlu0 %650, %v617
      %v652 = vpop.permute.xlu0 %651
      %655 = vset.pattern.permute.xlu0 0
      %656 = vperm.xlu0 %655, %v618
      %v657 = vpop.permute.xlu0 %656
      %v659 = vmul.f32 %v595, %v622
      %v660 = vmul.f32 %v596, %v622
      %v661 = vmul.f32 %v597, %v627
      %v662 = vmul.f32 %v598, %v627
      %v663 = vmul.f32 %v599, %v632
      %v664 = vmul.f32 %v600, %v632
      %v665 = vmul.f32 %v601, %v637
      %v666 = vmul.f32 %v602, %v637
      %v667 = vmul.f32 %v603, %v642
      %v668 = vmul.f32 %v604, %v642
      %v669 = vmul.f32 %v605, %v647
      %v670 = vmul.f32 %v606, %v647
      %v671 = vmul.f32 %v607, %v652
      %v672 = vmul.f32 %v608, %v652
      %v673 = vmul.f32 %v609, %v657
      %v674 = vmul.f32 %v610, %v657
      %v675 = vld [vmem:[%s2] sm:$0xff]
      %v676 = vld [vmem:[%s2 + $0x8] sm:$0xff]
      %v677 = vld [vmem:[%s2 + $0x10] sm:$0xff]
      %v678 = vld [vmem:[%s2 + $0x18] sm:$0xff]
      %v679 = vld [vmem:[%s2 + $0x20] sm:$0xff]
      %v680 = vld [vmem:[%s2 + $0x28] sm:$0xff]
      %v681 = vld [vmem:[%s2 + $0x30] sm:$0xff]
      %v682 = vld [vmem:[%s2 + $0x38] sm:$0xff]
      %684 = vset.pattern.permute.xlu0 0
      %685 = vperm.xlu0 %684, %v675
      %v686 = vpop.permute.xlu0 %685
      %689 = vset.pattern.permute.xlu0 0
      %690 = vperm.xlu0 %689, %v676
      %v691 = vpop.permute.xlu0 %690
      %694 = vset.pattern.permute.xlu0 0
      %695 = vperm.xlu0 %694, %v677
      %v696 = vpop.permute.xlu0 %695
      %699 = vset.pattern.permute.xlu0 0
      %700 = vperm.xlu0 %699, %v678
      %v701 = vpop.permute.xlu0 %700
      %704 = vset.pattern.permute.xlu0 0
      %705 = vperm.xlu0 %704, %v679
      %v706 = vpop.permute.xlu0 %705
      %709 = vset.pattern.permute.xlu0 0
      %710 = vperm.xlu0 %709, %v680
      %v711 = vpop.permute.xlu0 %710
      %714 = vset.pattern.permute.xlu0 0
      %715 = vperm.xlu0 %714, %v681
      %v716 = vpop.permute.xlu0 %715
      %719 = vset.pattern.permute.xlu0 0
      %720 = vperm.xlu0 %719, %v682
      %v721 = vpop.permute.xlu0 %720
      %v723 = vadd.f32 %v659, %v686
      %v724 = vadd.f32 %v660, %v686
      %v725 = vadd.f32 %v661, %v691
      %v726 = vadd.f32 %v662, %v691
      %v727 = vadd.f32 %v663, %v696
      %v728 = vadd.f32 %v664, %v696
      %v729 = vadd.f32 %v665, %v701
      %v730 = vadd.f32 %v666, %v701
      %v731 = vadd.f32 %v667, %v706
      %v732 = vadd.f32 %v668, %v706
      %v733 = vadd.f32 %v669, %v711
      %v734 = vadd.f32 %v670, %v711
      %v735 = vadd.f32 %v671, %v716
      %v736 = vadd.f32 %v672, %v716
      %v737 = vadd.f32 %v673, %v721
      %v738 = vadd.f32 %v674, %v721
      %vm739 = vcmp.gt.f32.partialorder %v723, 20.0
      %vm740 = vcmp.gt.f32.partialorder %v724, 20.0
      %vm741 = vcmp.gt.f32.partialorder %v725, 20.0
      %vm742 = vcmp.gt.f32.partialorder %v726, 20.0
      %vm743 = vcmp.gt.f32.partialorder %v727, 20.0
      %vm744 = vcmp.gt.f32.partialorder %v728, 20.0
      %vm745 = vcmp.gt.f32.partialorder %v729, 20.0
      %vm746 = vcmp.gt.f32.partialorder %v730, 20.0
      %vm747 = vcmp.gt.f32.partialorder %v731, 20.0
      %vm748 = vcmp.gt.f32.partialorder %v732, 20.0
      %vm749 = vcmp.gt.f32.partialorder %v733, 20.0
      %vm750 = vcmp.gt.f32.partialorder %v734, 20.0
      %vm751 = vcmp.gt.f32.partialorder %v735, 20.0
      %vm752 = vcmp.gt.f32.partialorder %v736, 20.0
      %vm753 = vcmp.gt.f32.partialorder %v737, 20.0
      %vm754 = vcmp.gt.f32.partialorder %v738, 20.0
      %v755 = vmin.f32 %v723, 20.0
      %v756 = vmin.f32 %v724, 20.0
      %v757 = vmin.f32 %v725, 20.0
      %v758 = vmin.f32 %v726, 20.0
      %v759 = vmin.f32 %v727, 20.0
      %v760 = vmin.f32 %v728, 20.0
      %v761 = vmin.f32 %v729, 20.0
      %v762 = vmin.f32 %v730, 20.0
      %v763 = vmin.f32 %v731, 20.0
      %v764 = vmin.f32 %v732, 20.0
      %v765 = vmin.f32 %v733, 20.0
      %v766 = vmin.f32 %v734, 20.0
      %v767 = vmin.f32 %v735, 20.0
      %v768 = vmin.f32 %v736, 20.0
      %v769 = vmin.f32 %v737, 20.0
      %v770 = vmin.f32 %v738, 20.0
      %v771 = vmul.f32 %v755, 1.442695
      %v772 = vpow.pop %v771
      %v773 = vmul.f32 %v756, 1.442695
      %v774 = vpow.pop %v773
      %v775 = vmul.f32 %v757, 1.442695
      %v776 = vpow.pop %v775
      %v777 = vmul.f32 %v758, 1.442695
      %v778 = vpow.pop %v777
      %v779 = vmul.f32 %v759, 1.442695
      %v780 = vpow.pop %v779
      %v781 = vmul.f32 %v760, 1.442695
      %v782 = vpow.pop %v781
      %v783 = vmul.f32 %v761, 1.442695
      %v784 = vpow.pop %v783
      %v785 = vmul.f32 %v762, 1.442695
      %v786 = vpow.pop %v785
      %v787 = vmul.f32 %v763, 1.442695
      %v788 = vpow.pop %v787
      %v789 = vmul.f32 %v764, 1.442695
      %v790 = vpow.pop %v789
      %v791 = vmul.f32 %v765, 1.442695
      %v792 = vpow.pop %v791
      %v793 = vmul.f32 %v766, 1.442695
      %v794 = vpow.pop %v793
      %v795 = vmul.f32 %v767, 1.442695
      %v796 = vpow.pop %v795
      %v797 = vmul.f32 %v768, 1.442695
      %v798 = vpow.pop %v797
      %v799 = vmul.f32 %v769, 1.442695
      %v800 = vpow.pop %v799
      %v801 = vmul.f32 %v770, 1.442695
      %v802 = vpow.pop %v801
      %v803 = vadd.f32 %v772, 1.0
      %v804 = vadd.f32 %v774, 1.0
      %v805 = vadd.f32 %v776, 1.0
      %v806 = vadd.f32 %v778, 1.0
      %v807 = vadd.f32 %v780, 1.0
      %v808 = vadd.f32 %v782, 1.0
      %v809 = vadd.f32 %v784, 1.0
      %v810 = vadd.f32 %v786, 1.0
      %v811 = vadd.f32 %v788, 1.0
      %v812 = vadd.f32 %v790, 1.0
      %v813 = vadd.f32 %v792, 1.0
      %v814 = vadd.f32 %v794, 1.0
      %v815 = vadd.f32 %v796, 1.0
      %v816 = vadd.f32 %v798, 1.0
      %v817 = vadd.f32 %v800, 1.0
      %v818 = vadd.f32 %v802, 1.0
      %v819 = vlog2.pop %v803
      %v820 = vmul.f32 %v819, 0.6931472
      %v821 = vlog2.pop %v804
      %v822 = vmul.f32 %v821, 0.6931472
      %v823 = vlog2.pop %v805
      %v824 = vmul.f32 %v823, 0.6931472
      %v825 = vlog2.pop %v806
      %v826 = vmul.f32 %v825, 0.6931472
      %v827 = vlog2.pop %v807
      %v828 = vmul.f32 %v827, 0.6931472
      %v829 = vlog2.pop %v808
      %v830 = vmul.f32 %v829, 0.6931472
      %v831 = vlog2.pop %v809
      %v832 = vmul.f32 %v831, 0.6931472
      %v833 = vlog2.pop %v810
      %v834 = vmul.f32 %v833, 0.6931472
      %v835 = vlog2.pop %v811
      %v836 = vmul.f32 %v835, 0.6931472
      %v837 = vlog2.pop %v812
      %v838 = vmul.f32 %v837, 0.6931472
      %v839 = vlog2.pop %v813
      %v840 = vmul.f32 %v839, 0.6931472
      %v841 = vlog2.pop %v814
      %v842 = vmul.f32 %v841, 0.6931472
      %v843 = vlog2.pop %v815
      %v844 = vmul.f32 %v843, 0.6931472
      %v845 = vlog2.pop %v816
      %v846 = vmul.f32 %v845, 0.6931472
      %v847 = vlog2.pop %v817
      %v848 = vmul.f32 %v847, 0.6931472
      %v849 = vlog2.pop %v818
      %v850 = vmul.f32 %v849, 0.6931472
      %v851 = vsel %vm739, %v723, %v820
      %v852 = vsel %vm740, %v724, %v822
      %v853 = vsel %vm741, %v725, %v824
      %v854 = vsel %vm742, %v726, %v826
      %v855 = vsel %vm743, %v727, %v828
      %v856 = vsel %vm744, %v728, %v830
      %v857 = vsel %vm745, %v729, %v832
      %v858 = vsel %vm746, %v730, %v834
      %v859 = vsel %vm747, %v731, %v836
      %v860 = vsel %vm748, %v732, %v838
      %v861 = vsel %vm749, %v733, %v840
      %v862 = vsel %vm750, %v734, %v842
      %v863 = vsel %vm751, %v735, %v844
      %v864 = vsel %vm752, %v736, %v846
      %v865 = vsel %vm753, %v737, %v848
      %v866 = vsel %vm754, %v738, %v850
      %v867 = vtanh.pop %v851
      %v868 = vtanh.pop %v852
      %v869 = vtanh.pop %v853
      %v870 = vtanh.pop %v854
      %v871 = vtanh.pop %v855
      %v872 = vtanh.pop %v856
      %v873 = vtanh.pop %v857
      %v874 = vtanh.pop %v858
      %v875 = vtanh.pop %v859
      %v876 = vtanh.pop %v860
      %v877 = vtanh.pop %v861
      %v878 = vtanh.pop %v862
      %v879 = vtanh.pop %v863
      %v880 = vtanh.pop %v864
      %v881 = vtanh.pop %v865
      %v882 = vtanh.pop %v866
      %v883 = vmul.f32 %v723, %v867
      %v884 = vmul.f32 %v724, %v868
      %v885 = vmul.f32 %v725, %v869
      %v886 = vmul.f32 %v726, %v870
      %v887 = vmul.f32 %v727, %v871
      %v888 = vmul.f32 %v728, %v872
      %v889 = vmul.f32 %v729, %v873
      %v890 = vmul.f32 %v730, %v874
      %v891 = vmul.f32 %v731, %v875
      %v892 = vmul.f32 %v732, %v876
      %v893 = vmul.f32 %v733, %v877
      %v894 = vmul.f32 %v734, %v878
      %v895 = vmul.f32 %v735, %v879
      %v896 = vmul.f32 %v736, %v880
      %v897 = vmul.f32 %v737, %v881
      %v898 = vmul.f32 %v738, %v882
      %899 = vst [vmem:[%s197] sm:$0xff] %v883
      %900 = vst [vmem:[%s197 + $0x8] sm:$0xff] %v884
      %901 = vst [vmem:[%s197 + $0x10] sm:$0xff] %v885
      %902 = vst [vmem:[%s197 + $0x18] sm:$0xff] %v886
      %903 = vst [vmem:[%s197 + $0x20] sm:$0xff] %v887
      %904 = vst [vmem:[%s197 + $0x28] sm:$0xff] %v888
      %905 = vst [vmem:[%s197 + $0x30] sm:$0xff] %v889
      %906 = vst [vmem:[%s197 + $0x38] sm:$0xff] %v890
      %907 = vst [vmem:[%s197 + $0x40] sm:$0xff] %v891
      %908 = vst [vmem:[%s197 + $0x48] sm:$0xff] %v892
      %909 = vst [vmem:[%s197 + $0x50] sm:$0xff] %v893
      %910 = vst [vmem:[%s197 + $0x58] sm:$0xff] %v894
      %911 = vst [vmem:[%s197 + $0x60] sm:$0xff] %v895
      %912 = vst [vmem:[%s197 + $0x68] sm:$0xff] %v896
      %913 = vst [vmem:[%s197 + $0x70] sm:$0xff] %v897
      %914 = vst [vmem:[%s197 + $0x78] sm:$0xff] %v898
      %p915 = scmp.lt.s32.totalorder %s15, 1
      %s916 = scalar_select %p915, %s15, 1
      %s917 = smul.addr %s916, 16
      %s918 = smul.addr %s917, 8
      %s919 = scalar_lea.vmem %s4, %s918
      // Predicated region
      $region37: #{conv_block_forward.2} parent=35 // pred_check
        %p920 = pneg %p122
      $region38: #{conv_block_forward.2} parent=35 // pred_check_branch
        %922 = sbr.rel (%p920) target = $region40
      $region39: #{conv_block_forward.2} parent=35 // pred_region
        _
      $region40: #{conv_block_forward.2} parent=35 // pred_fallthru
        _
    $region36: #{conv_block_forward.2} parent=5 // pred_fallthru
      _
    %p923 = scmp.le.s32.totalorder 2, %s10
    // Predicated region
    $region41: #{conv_block_forward.2} parent=5 // pred_check
      %p924 = pneg %p923
    $region42: #{conv_block_forward.2} parent=5 // pred_check_branch
      %926 = sbr.rel (%p924) target = $region44
    $region43: #{conv_block_forward.2} parent=5 // pred_region
      %s927 = ssub.s32 %s10, 2
      // Predicated region
      $region45: #{conv_block_forward.2} parent=43 // pred_check
        %p928 = pneg %p128
      $region46: #{conv_block_forward.2} parent=43 // pred_check_branch
        %930 = sbr.rel (%p928) target = $region48
      $region47: #{conv_block_forward.2} parent=43 // pred_region
        %p931 = scmp.lt.s32.totalorder %s16, 1
        %s932 = scalar_select %p931, %s16, 1
        %s933 = smul.addr %s932, 16
        %s934 = smul.addr %s933, 8
        %s935 = scalar_lea.vmem %s4, %s934
      $region48: #{conv_block_forward.2} parent=43 // pred_fallthru
        _
    $region44: #{conv_block_forward.2} parent=5 // pred_fallthru
      _
  $region6: #{conv_block_forward.2} parent=0 // loop_footer
    %s14 = sadd.s32 1, %s10
  $region7: #{conv_block_forward.2} parent=0 // loop_footer_branch
    %9 = sbr.rel target = $region3
  $region8: #{conv_block_forward.2} parent=0 // loop_exit
    _

// kernel: conv_block_forward.3
$region0: #{conv_block_forward.3}
  #allocation0 [shape = 'u32[]', space=smem, size = 0x4, offset = 0x4, fixed_abs, tag = 'smem constant byte address 0x4 - core index']
  #allocation1 [shape = 'u32[72,128]{1,0:T(1,128)}', space=vmem, size = 0x9000, scoped, tag = 'internal scratch']
  %s0 = inlined_call_operand.vmem [shape: f32[2,576,256], index: 0, kind: input, shape index: {}]
  %s1 = inlined_call_operand.vmem [shape: f32[32,576], index: 1, kind: input, shape index: {}]
  %s2 = inlined_call_operand.vmem [shape: f32[32,1], index: 2, kind: input, shape index: {}]
  %s3 = inlined_call_operand.vmem [shape: f32[2,32,256], index: 3, kind: output, shape index: {}]
  %s4 = sld [smem:[#allocation0]]
  $region45: #{conv_block_forward.3} parent=0
    _
  %s6 = ssub.s32 1, %s4
  %s7 = scalar_select 0, %s6, %s4
  loop: start=0, step=1, limit=4
  $region2: #{conv_block_forward.3} parent=0 // loop_pre_header
    _
  $region3: #{conv_block_forward.3} parent=0 // loop_header
    %s9 = sphi 0, %s13
    %p10 = scmp.ge.s32.totalorder %s9, 4
    %s19 = sphi 0, %s21
    %s22 = sphi 0, %s19
    %s23 = sphi 0, %s22
    %s39 = sphi 0, %s23
    %s43 = sphi 0, %s43
    %s45 = sphi 0, %s43
    %s46 = sphi 0, %s45
    %s60 = sphi 0, %s46
    %s64 = sphi 0, %s64
    %s66 = sphi 0, %s64
    %s67 = sphi 0, %s66
    %s81 = sphi 0, %s67
    %s87 = sphi 0, %s89
    %s90 = sphi 0, %s87
    %s91 = sphi 0, %s90
    %s107 = sphi 0, %s91
  $region4: #{conv_block_forward.3} parent=0 // loop_header_branch
    %12 = sbr.rel (%p10) target = $region8
  $region5: #{conv_block_forward.3} parent=0 // loop_body
    %s14 = ssub.s32 %s9, 1
    %s15 = ssub.s32 %s9, 2
    %s16 = sadd.s32 %s9, 1
    %s17 = ssub.s32 %s9, %s16
    %p18 = scmp.eq.s32.totalorder %s17, 0
    %s20 = sadd.s32 %s19, 1
    %s21 = scalar_select %p18, %s19, %s20
    %p24 = pneg %p18
    %p25 = scmp.eq.s32.totalorder %s9, 1
    %p26 = por %p24, %p25
    %p27 = scmp.ne.s32.totalorder %s19, %s22
    %p28 = scmp.eq.s32.totalorder %s9, 0
    %p29 = por %p27, %p28
    %p30 = scmp.ne.s32.totalorder %s19, %s22
    %p31 = scmp.eq.s32.totalorder %s14, 1
    %p32 = por %p30, %p31
    %p33 = scmp.ne.s32.totalorder %s22, %s23
    %p34 = scmp.eq.s32.totalorder %s14, 0
    %p35 = por %p33, %p34
    %p36 = scmp.ne.s32.totalorder %s22, %s23
    %p37 = scmp.eq.s32.totalorder %s15, 1
    %p38 = por %p36, %p37
    %p40 = scmp.ne.s32.totalorder %s23, %s39
    %p41 = scmp.eq.s32.totalorder %s15, 0
    %p42 = por %p40, %p41
    %s44 = sadd.s32 %s43, 1
    %p47 = scmp.eq.s32.totalorder %s9, 1
    %p48 = scmp.ne.s32.totalorder %s43, %s45
    %p49 = scmp.eq.s32.totalorder %s9, 0
    %p50 = por %p48, %p49
    %p51 = scmp.ne.s32.totalorder %s43, %s45
    %p52 = scmp.eq.s32.totalorder %s14, 1
    %p53 = por %p51, %p52
    %p54 = scmp.ne.s32.totalorder %s45, %s46
    %p55 = scmp.eq.s32.totalorder %s14, 0
    %p56 = por %p54, %p55
    %p57 = scmp.ne.s32.totalorder %s45, %s46
    %p58 = scmp.eq.s32.totalorder %s15, 1
    %p59 = por %p57, %p58
    %p61 = scmp.ne.s32.totalorder %s46, %s60
    %p62 = scmp.eq.s32.totalorder %s15, 0
    %p63 = por %p61, %p62
    %s65 = sadd.s32 %s64, 1
    %p68 = scmp.eq.s32.totalorder %s9, 1
    %p69 = scmp.ne.s32.totalorder %s64, %s66
    %p70 = scmp.eq.s32.totalorder %s9, 0
    %p71 = por %p69, %p70
    %p72 = scmp.ne.s32.totalorder %s64, %s66
    %p73 = scmp.eq.s32.totalorder %s14, 1
    %p74 = por %p72, %p73
    %p75 = scmp.ne.s32.totalorder %s66, %s67
    %p76 = scmp.eq.s32.totalorder %s14, 0
    %p77 = por %p75, %p76
    %p78 = scmp.ne.s32.totalorder %s66, %s67
    %p79 = scmp.eq.s32.totalorder %s15, 1
    %p80 = por %p78, %p79
    %p82 = scmp.ne.s32.totalorder %s67, %s81
    %p83 = scmp.eq.s32.totalorder %s15, 0
    %p84 = por %p82, %p83
    %s85 = ssub.s32 %s9, %s16
    %p86 = scmp.eq.s32.totalorder %s85, 0
    %s88 = sadd.s32 %s87, 1
    %s89 = scalar_select %p86, %s87, %s88
    %p92 = pneg %p86
    %p93 = scmp.eq.s32.totalorder %s9, 1
    %p94 = por %p92, %p93
    %p95 = scmp.ne.s32.totalorder %s87, %s90
    %p96 = scmp.eq.s32.totalorder %s9, 0
    %p97 = por %p95, %p96
    %p98 = scmp.ne.s32.totalorder %s87, %s90
    %p99 = scmp.eq.s32.totalorder %s14, 1
    %p100 = por %p98, %p99
    %p101 = scmp.ne.s32.totalorder %s90, %s91
    %p102 = scmp.eq.s32.totalorder %s14, 0
    %p103 = por %p101, %p102
    %p104 = scmp.ne.s32.totalorder %s90, %s91
    %p105 = scmp.eq.s32.totalorder %s15, 1
    %p106 = por %p104, %p105
    %p108 = scmp.ne.s32.totalorder %s91, %s107
    %p109 = scmp.eq.s32.totalorder %s15, 0
    %p110 = por %p108, %p109
    %p111 = scmp.le.s32.totalorder 1, %s9
    %p112 = scmp.lt.s32.totalorder %s9, 3
    %p113 = pnand %p111, %p112
    %p114 = pneg %p113
    // Predicated region
    $region9: #{conv_block_forward.3} parent=5 // pred_check
      _
    $region10: #{conv_block_forward.3} parent=5 // pred_check_branch
      %116 = sbr.rel (%p113) target = $region12
    $region11: #{conv_block_forward.3} parent=5 // pred_region
      %s117 = ssub.s32 %s9, 1
      // Predicated region
      $region13: #{conv_block_forward.3} parent=11 // pred_check
        %p118 = pneg %p56
      $region14: #{conv_block_forward.3} parent=11 // pred_check_branch
        %120 = sbr.rel (%p118) target = $region16
      $region15: #{conv_block_forward.3} parent=11 // pred_region
        _
      $region16: #{conv_block_forward.3} parent=11 // pred_fallthru
        _
      // Predicated region
      $region17: #{conv_block_forward.3} parent=11 // pred_check
        %p121 = pneg %p77
      $region18: #{conv_block_forward.3} parent=11 // pred_check_branch
        %123 = sbr.rel (%p121) target = $region20
      $region19: #{conv_block_forward.3} parent=11 // pred_region
        _
      $region20: #{conv_block_forward.3} parent=11 // pred_fallthru
        _
    $region12: #{conv_block_forward.3} parent=5 // pred_fallthru
      _
    %p124 = scmp.lt.s32.totalorder %s9, 2
    // Predicated region
    $region21: #{conv_block_forward.3} parent=5 // pred_check
      %p125 = pneg %p124
    $region22: #{conv_block_forward.3} parent=5 // pred_check_branch
      %127 = sbr.rel (%p125) target = $region24
    $region23: #{conv_block_forward.3} parent=5 // pred_region
      // Predicated region
      $region25: #{conv_block_forward.3} parent=23 // pred_check
        %p128 = pneg %p29
      $region26: #{conv_block_forward.3} parent=23 // pred_check_branch
        %130 = sbr.rel (%p128) target = $region28
      $region27: #{conv_block_forward.3} parent=23 // pred_region
        %p131 = scmp.lt.s32.totalorder %s9, 1
        %s132 = scalar_select %p131, %s9, 1
        %s133 = smul.addr %s132, 144
        %s134 = smul.addr %s133, 8
        %s135 = scalar_lea.vmem %s0, %s134
      $region28: #{conv_block_forward.3} parent=23 // pred_fallthru
        _
    $region24: #{conv_block_forward.3} parent=5 // pred_fallthru
      _
    %p136 = scmp.le.s32.totalorder 1, %s9
    %p137 = scmp.lt.s32.totalorder %s9, 3
    %p138 = pnand %p136, %p137
    %p139 = pneg %p138
    // Predicated region
    $region29: #{conv_block_forward.3} parent=5 // pred_check
      _
    $region30: #{conv_block_forward.3} parent=5 // pred_check_branch
      %141 = sbr.rel (%p138) target = $region32
    $region31: #{conv_block_forward.3} parent=5 // pred_region
      %s142 = ssub.s32 %s9, 1
      %p143 = scmp.lt.s32.totalorder %s14, 1
      %s144 = scalar_select %p143, %s14, 1
      %s145 = smul.addr %s144, 144
      %s146 = smul.addr %s145, 8
      %s147 = scalar_lea.vmem %s0, %s146
      %p148 = pneg %p35
      %p149 = pneg %p32
      %p150 = pneg %p56
      %p151 = pneg %p53
      %p152 = pneg %p77
      %p153 = pneg %p74
      %p154 = pneg %p103
      %p155 = pneg %p100
      %p156 = scmp.lt.s32.totalorder %s14, 1
      %s157 = scalar_select %p156, %s14, 1
      %s158 = smul.addr %s157, 8
      %s159 = smul.addr %s158, 8
      %s160 = scalar_lea.vmem %s3, %s159
      %p161 = scmp.lt.s32.totalorder %s14, 1
      %s162 = scalar_select %p161, %s14, 1
      %s163 = smul.addr %s162, 144
      %s164 = smul.addr %s163, 8
      %s165 = scalar_lea.vmem %s0, %s164
      %p166 = scmp.lt.s32.totalorder %s14, 1
      %s167 = scalar_select %p166, %s14, 1
      %s168 = smul.addr %s167, 8
      %s169 = smul.addr %s168, 8
      %s170 = scalar_lea.vmem %s3, %s169
      %v171 = vld [vmem:[%s1] sm:$0xff]
      %v172 = vld [vmem:[%s1 + $0x8] sm:$0xff]
      %v173 = vld [vmem:[%s1 + $0x10] sm:$0xff]
      %v174 = vld [vmem:[%s1 + $0x18] sm:$0xff]
      %v175 = vld [vmem:[%s1 + $0x20] sm:$0xff]
      %v176 = vld [vmem:[%s1 + $0x28] sm:$0xff]
      %v177 = vld [vmem:[%s1 + $0x30] sm:$0xff]
      %v178 = vld [vmem:[%s1 + $0x38] sm:$0xff]
      %v179 = vld [vmem:[%s1 + $0x40] sm:$0xff]
      %v180 = vld [vmem:[%s1 + $0x48] sm:$0xff]
      %v181 = vld [vmem:[%s1 + $0x50] sm:$0xff]
      %v182 = vld [vmem:[%s1 + $0x58] sm:$0xff]
      %v183 = vld [vmem:[%s1 + $0x60] sm:$0xff]
      %v184 = vld [vmem:[%s1 + $0x68] sm:$0xff]
      %v185 = vld [vmem:[%s1 + $0x70] sm:$0xff]
      %v186 = vld [vmem:[%s1 + $0x78] sm:$0xff]
      %v187 = vld [vmem:[%s1 + $0x80] sm:$0xff]
      %v188 = vld [vmem:[%s1 + $0x88] sm:$0xff]
      %v189 = vld [vmem:[%s1 + $0x90] sm:$0xff]
      %v190 = vld [vmem:[%s1 + $0x98] sm:$0xff]
      %v191 = vld [vmem:[%s165] sm:$0xff]
      %v192 = vld [vmem:[%s165 + $0x8] sm:$0xff]
      %v193 = vld [vmem:[%s165 + $0x10] sm:$0xff]
      %v194 = vld [vmem:[%s165 + $0x18] sm:$0xff]
      %v195 = vld [vmem:[%s165 + $0x20] sm:$0xff]
      %v196 = vld [vmem:[%s165 + $0x28] sm:$0xff]
      %v197 = vld [vmem:[%s165 + $0x30] sm:$0xff]
      %v198 = vld [vmem:[%s165 + $0x38] sm:$0xff]
      %v199 = vld [vmem:[%s165 + $0x40] sm:$0xff]
      %v200 = vld [vmem:[%s165 + $0x48] sm:$0xff]
      %v201 = vld [vmem:[%s165 + $0x50] sm:$0xff]
      %v202 = vld [vmem:[%s165 + $0x58] sm:$0xff]
      %v203 = vld [vmem:[%s165 + $0x60] sm:$0xff]
      %v204 = vld [vmem:[%s165 + $0x68] sm:$0xff]
      %v205 = vld [vmem:[%s165 + $0x70] sm:$0xff]
      %v206 = vld [vmem:[%s165 + $0x78] sm:$0xff]
      %v207 = vld [vmem:[%s165 + $0x80] sm:$0xff]
      %v208 = vld [vmem:[%s165 + $0x88] sm:$0xff]
      %v209 = vld [vmem:[%s165 + $0x90] sm:$0xff]
      %v210 = vld [vmem:[%s165 + $0x98] sm:$0xff]
      %v211 = vld [vmem:[%s165 + $0xa0] sm:$0xff]
      %v212 = vld [vmem:[%s165 + $0xa8] sm:$0xff]
      %v213 = vld [vmem:[%s165 + $0xb0] sm:$0xff]
      %v214 = vld [vmem:[%s165 + $0xb8] sm:$0xff]
      %v215 = vld [vmem:[%s165 + $0xc0] sm:$0xff]
      %v216 = vld [vmem:[%s165 + $0xc8] sm:$0xff]
      %v217 = vld [vmem:[%s165 + $0xd0] sm:$0xff]
      %v218 = vld [vmem:[%s165 + $0xd8] sm:$0xff]
      %v219 = vld [vmem:[%s165 + $0xe0] sm:$0xff]
      %v220 = vld [vmem:[%s165 + $0xe8] sm:$0xff]
      %v221 = vld [vmem:[%s165 + $0xf0] sm:$0xff]
      %v222 = vld [vmem:[%s165 + $0xf8] sm:$0xff]
      %v223 = vld [vmem:[%s165 + $0x100] sm:$0xff]
      %v224 = vld [vmem:[%s165 + $0x108] sm:$0xff]
      %v225 = vld [vmem:[%s165 + $0x110] sm:$0xff]
      %v226 = vld [vmem:[%s165 + $0x118] sm:$0xff]
      %v227 = vld [vmem:[%s165 + $0x120] sm:$0xff]
      %v228 = vld [vmem:[%s165 + $0x128] sm:$0xff]
      %v229 = vld [vmem:[%s165 + $0x130] sm:$0xff]
      %v230 = vld [vmem:[%s165 + $0x138] sm:$0xff]
      %v231 = vld [vmem:[%s165 + $0x140] sm:$0xff]
      %v232 = vld [vmem:[%s165 + $0x148] sm:$0xff]
      %v233 = vld [vmem:[%s165 + $0x150] sm:$0xff]
      %v234 = vld [vmem:[%s165 + $0x158] sm:$0xff]
      %v235 = vld [vmem:[%s165 + $0x160] sm:$0xff]
      %v236 = vld [vmem:[%s165 + $0x168] sm:$0xff]
      %v237 = vld [vmem:[%s165 + $0x170] sm:$0xff]
      %v238 = vld [vmem:[%s165 + $0x178] sm:$0xff]
      %v239 = vld [vmem:[%s165 + $0x180] sm:$0xff]
      %v240 = vld [vmem:[%s165 + $0x188] sm:$0xff]
      %v241 = vld [vmem:[%s165 + $0x190] sm:$0xff]
      %v242 = vld [vmem:[%s165 + $0x198] sm:$0xff]
      %v243 = vld [vmem:[%s165 + $0x1a0] sm:$0xff]
      %v244 = vld [vmem:[%s165 + $0x1a8] sm:$0xff]
      %v245 = vld [vmem:[%s165 + $0x1b0] sm:$0xff]
      %v246 = vld [vmem:[%s165 + $0x1b8] sm:$0xff]
      %v247 = vld [vmem:[%s165 + $0x1c0] sm:$0xff]
      %v248 = vld [vmem:[%s165 + $0x1c8] sm:$0xff]
      %v249 = vld [vmem:[%s165 + $0x1d0] sm:$0xff]
      %v250 = vld [vmem:[%s165 + $0x1d8] sm:$0xff]
      %v251 = vld [vmem:[%s165 + $0x1e0] sm:$0xff]
      %v252 = vld [vmem:[%s165 + $0x1e8] sm:$0xff]
      %v253 = vld [vmem:[%s165 + $0x1f0] sm:$0xff]
      %v254 = vld [vmem:[%s165 + $0x1f8] sm:$0xff]
      %v255 = vld [vmem:[%s165 + $0x200] sm:$0xff]
      %v256 = vld [vmem:[%s165 + $0x208] sm:$0xff]
      %v257 = vld [vmem:[%s165 + $0x210] sm:$0xff]
      %v258 = vld [vmem:[%s165 + $0x218] sm:$0xff]
      %v259 = vld [vmem:[%s165 + $0x220] sm:$0xff]
      %v260 = vld [vmem:[%s165 + $0x228] sm:$0xff]
      %v261 = vld [vmem:[%s165 + $0x230] sm:$0xff]
      %v262 = vld [vmem:[%s165 + $0x238] sm:$0xff]
      %v263 = vld [vmem:[%s165 + $0x240] sm:$0xff]
      %v264 = vld [vmem:[%s165 + $0x248] sm:$0xff]
      %v265 = vld [vmem:[%s165 + $0x250] sm:$0xff]
      %v266 = vld [vmem:[%s165 + $0x258] sm:$0xff]
      %v267 = vld [vmem:[%s165 + $0x260] sm:$0xff]
      %v268 = vld [vmem:[%s165 + $0x268] sm:$0xff]
      %v269 = vld [vmem:[%s165 + $0x270] sm:$0xff]
      %v270 = vld [vmem:[%s165 + $0x278] sm:$0xff]
      %v271 = vld [vmem:[%s165 + $0x280] sm:$0xff]
      %v272 = vld [vmem:[%s165 + $0x288] sm:$0xff]
      %v273 = vld [vmem:[%s165 + $0x290] sm:$0xff]
      %v274 = vld [vmem:[%s165 + $0x298] sm:$0xff]
      %v275 = vld [vmem:[%s165 + $0x2a0] sm:$0xff]
      %v276 = vld [vmem:[%s165 + $0x2a8] sm:$0xff]
      %v277 = vld [vmem:[%s165 + $0x2b0] sm:$0xff]
      %v278 = vld [vmem:[%s165 + $0x2b8] sm:$0xff]
      %v279 = vld [vmem:[%s165 + $0x2c0] sm:$0xff]
      %v280 = vld [vmem:[%s165 + $0x2c8] sm:$0xff]
      %v281 = vld [vmem:[%s165 + $0x2d0] sm:$0xff]
      %v282 = vld [vmem:[%s165 + $0x2d8] sm:$0xff]
      %v283 = vld [vmem:[%s165 + $0x2e0] sm:$0xff]
      %v284 = vld [vmem:[%s165 + $0x2e8] sm:$0xff]
      %v285 = vld [vmem:[%s165 + $0x2f0] sm:$0xff]
      %v286 = vld [vmem:[%s165 + $0x2f8] sm:$0xff]
      %v287 = vld [vmem:[%s165 + $0x300] sm:$0xff]
      %v288 = vld [vmem:[%s165 + $0x308] sm:$0xff]
      %v289 = vld [vmem:[%s165 + $0x310] sm:$0xff]
      %v290 = vld [vmem:[%s165 + $0x318] sm:$0xff]
      %v291 = vld [vmem:[%s165 + $0x320] sm:$0xff]
      %v292 = vld [vmem:[%s165 + $0x328] sm:$0xff]
      %v293 = vld [vmem:[%s165 + $0x330] sm:$0xff]
      %v294 = vld [vmem:[%s165 + $0x338] sm:$0xff]
      %v295 = vld [vmem:[%s165 + $0x340] sm:$0xff]
      %v296 = vld [vmem:[%s165 + $0x348] sm:$0xff]
      %v297 = vld [vmem:[%s165 + $0x350] sm:$0xff]
      %v298 = vld [vmem:[%s165 + $0x358] sm:$0xff]
      %v299 = vld [vmem:[%s165 + $0x360] sm:$0xff]
      %v300 = vld [vmem:[%s165 + $0x368] sm:$0xff]
      %v301 = vld [vmem:[%s165 + $0x370] sm:$0xff]
      %v302 = vld [vmem:[%s165 + $0x378] sm:$0xff]
      %v303 = vld [vmem:[%s165 + $0x380] sm:$0xff]
      %v304 = vld [vmem:[%s165 + $0x388] sm:$0xff]
      %v305 = vld [vmem:[%s165 + $0x390] sm:$0xff]
      %v306 = vld [vmem:[%s165 + $0x398] sm:$0xff]
      %v307 = vld [vmem:[%s165 + $0x3a0] sm:$0xff]
      %v308 = vld [vmem:[%s165 + $0x3a8] sm:$0xff]
      %v309 = vld [vmem:[%s165 + $0x3b0] sm:$0xff]
      %v310 = vld [vmem:[%s165 + $0x3b8] sm:$0xff]
      %v311 = vld [vmem:[%s165 + $0x3c0] sm:$0xff]
      %v312 = vld [vmem:[%s165 + $0x3c8] sm:$0xff]
      %v313 = vld [vmem:[%s165 + $0x3d0] sm:$0xff]
      %v314 = vld [vmem:[%s165 + $0x3d8] sm:$0xff]
      %v315 = vld [vmem:[%s165 + $0x3e0] sm:$0xff]
      %v316 = vld [vmem:[%s165 + $0x3e8] sm:$0xff]
      %v317 = vld [vmem:[%s165 + $0x3f0] sm:$0xff]
      %v318 = vld [vmem:[%s165 + $0x3f8] sm:$0xff]
      %v319 = vld [vmem:[%s165 + $0x400] sm:$0xff]
      %v320 = vld [vmem:[%s165 + $0x408] sm:$0xff]
      %v321 = vld [vmem:[%s165 + $0x410] sm:$0xff]
      %v322 = vld [vmem:[%s165 + $0x418] sm:$0xff]
      %v323 = vld [vmem:[%s165 + $0x420] sm:$0xff]
      %v324 = vld [vmem:[%s165 + $0x428] sm:$0xff]
      %v325 = vld [vmem:[%s165 + $0x430] sm:$0xff]
      %v326 = vld [vmem:[%s165 + $0x438] sm:$0xff]
      %v327 = vld [vmem:[%s165 + $0x440] sm:$0xff]
      %v328 = vld [vmem:[%s165 + $0x448] sm:$0xff]
      %v329 = vld [vmem:[%s165 + $0x450] sm:$0xff]
      %v330 = vld [vmem:[%s165 + $0x458] sm:$0xff]
      %v331 = vld [vmem:[%s165 + $0x460] sm:$0xff]
      %v332 = vld [vmem:[%s165 + $0x468] sm:$0xff]
      %v333 = vld [vmem:[%s165 + $0x470] sm:$0xff]
      %v334 = vld [vmem:[%s165 + $0x478] sm:$0xff]
      %v335 = vld [vmem:[%s2] sm:$0xff]
      %v336 = vld [vmem:[%s2 + $0x8] sm:$0xff]
      %v337 = vld [vmem:[%s2 + $0x10] sm:$0xff]
      %v338 = vld [vmem:[%s2 + $0x18] sm:$0xff]
      %340 = vset.pattern.permute.xlu0 0
      %341 = vperm.xlu0 %340, %v335
      %v342 = vpop.permute.xlu0 %341
      %345 = vset.pattern.permute.xlu0 0
      %346 = vperm.xlu0 %345, %v336
      %v347 = vpop.permute.xlu0 %346
      %350 = vset.pattern.permute.xlu0 0
      %351 = vperm.xlu0 %350, %v337
      %v352 = vpop.permute.xlu0 %351
      %355 = vset.pattern.permute.xlu0 0
      %356 = vperm.xlu0 %355, %v338
      %v357 = vpop.permute.xlu0 %356
      %vm359 = vcmask 523264
      %v361 = vsel %vm359, %v175, 0
      %v364 = vsel %vm359, %v180, 0
      %v367 = vsel %vm359, %v185, 0
      %v370 = vsel %vm359, %v190, 0
      %372 = vmatpush.msra.mxu0 %v221
      %373 = vmatpush.msra.mxu0 %v219
      %374 = vmatpush.msra.mxu0 %v217
      %375 = vmatpush.msra.mxu0 %v215
      %376 = vmatpush.msra.mxu0 %v213
      %377 = vmatpush.msra.mxu0 %v211
      %378 = vmatpush.msra.mxu0 %v209
      %379 = vmatpush.msra.mxu0 %v207
      %380 = vmatpush.msra.mxu0 %v205
      %381 = vmatpush.msra.mxu0 %v203
      %382 = vmatpush.msra.mxu0 %v201
      %383 = vmatpush.msra.mxu0 %v199
      %384 = vmatpush.msra.mxu0 %v197
      %385 = vmatpush.msra.mxu0 %v195
      %386 = vmatpush.msra.mxu0 %v193
      %387 = vmatpush.msra.mxu0 %v191
      %388 = vmatmul.f32.gmra.mxu0 %v171
      %v389 = vpop.f32.mrf.mxu0
      %v390 = vadd.f32 %v342, %v389
      %391 = vmatmul.f32.gmra.mxu0 %v176
      %v392 = vpop.f32.mrf.mxu0
      %v393 = vadd.f32 %v347, %v392
      %394 = vmatmul.f32.gmra.mxu0 %v181
      %v395 = vpop.f32.mrf.mxu0
      %v396 = vadd.f32 %v352, %v395
      %397 = vmatmul.f32.gmra.mxu0 %v186
      %v398 = vpop.f32.mrf.mxu0
      %v399 = vadd.f32 %v357, %v398
      %400 = vdwg.mxu0
      %401 = vmatpush.msra.mxu0 %v253
      %402 = vmatpush.msra.mxu0 %v251
      %403 = vmatpush.msra.mxu0 %v249
      %404 = vmatpush.msra.mxu0 %v247
      %405 = vmatpush.msra.mxu0 %v245
      %406 = vmatpush.msra.mxu0 %v243
      %407 = vmatpush.msra.mxu0 %v241
      %408 = vmatpush.msra.mxu0 %v239
      %409 = vmatpush.msra.mxu0 %v237
      %410 = vmatpush.msra.mxu0 %v235
      %411 = vmatpush.msra.mxu0 %v233
      %412 = vmatpush.msra.mxu0 %v231
      %413 = vmatpush.msra.mxu0 %v229
      %414 = vmatpush.msra.mxu0 %v227
      %415 = vmatpush.msra.mxu0 %v225
      %416 = vmatpush.msra.mxu0 %v223
      %417 = vmatmul.f32.gmra.mxu0 %v172
      %v418 = vpop.f32.mrf.mxu0
      %v419 = vadd.f32 %v390, %v418
      %420 = vmatmul.f32.gmra.mxu0 %v177
      %v421 = vpop.f32.mrf.mxu0
      %v422 = vadd.f32 %v393, %v421
      %423 = vmatmul.f32.gmra.mxu0 %v182
      %v424 = vpop.f32.mrf.mxu0
      %v425 = vadd.f32 %v396, %v424
      %426 = vmatmul.f32.gmra.mxu0 %v187
      %v427 = vpop.f32.mrf.mxu0
      %v428 = vadd.f32 %v399, %v427
      %429 = vdwg.mxu0
      %430 = vmatpush.msra.mxu0 %v285
      %431 = vmatpush.msra.mxu0 %v283
      %432 = vmatpush.msra.mxu0 %v281
      %433 = vmatpush.msra.mxu0 %v279
      %434 = vmatpush.msra.mxu0 %v277
      %435 = vmatpush.msra.mxu0 %v275
      %436 = vmatpush.msra.mxu0 %v273
      %437 = vmatpush.msra.mxu0 %v271
      %438 = vmatpush.msra.mxu0 %v269
      %439 = vmatpush.msra.mxu0 %v267
      %440 = vmatpush.msra.mxu0 %v265
      %441 = vmatpush.msra.mxu0 %v263
      %442 = vmatpush.msra.mxu0 %v261
      %443 = vmatpush.msra.mxu0 %v259
      %444 = vmatpush.msra.mxu0 %v257
      %445 = vmatpush.msra.mxu0 %v255
      %446 = vmatmul.f32.gmra.mxu0 %v173
      %v447 = vpop.f32.mrf.mxu0
      %v448 = vadd.f32 %v419, %v447
      %449 = vmatmul.f32.gmra.mxu0 %v178
      %v450 = vpop.f32.mrf.mxu0
      %v451 = vadd.f32 %v422, %v450
      %452 = vmatmul.f32.gmra.mxu0 %v183
      %v453 = vpop.f32.mrf.mxu0
      %v454 = vadd.f32 %v425, %v453
      %455 = vmatmul.f32.gmra.mxu0 %v188
      %v456 = vpop.f32.mrf.mxu0
      %v457 = vadd.f32 %v428, %v456
      %458 = vdwg.mxu0
      %459 = vmatpush.msra.mxu0 %v317
      %460 = vmatpush.msra.mxu0 %v315
      %461 = vmatpush.msra.mxu0 %v313
      %462 = vmatpush.msra.mxu0 %v311
      %463 = vmatpush.msra.mxu0 %v309
      %464 = vmatpush.msra.mxu0 %v307
      %465 = vmatpush.msra.mxu0 %v305
      %466 = vmatpush.msra.mxu0 %v303
      %467 = vmatpush.msra.mxu0 %v301
      %468 = vmatpush.msra.mxu0 %v299
      %469 = vmatpush.msra.mxu0 %v297
      %470 = vmatpush.msra.mxu0 %v295
      %471 = vmatpush.msra.mxu0 %v293
      %472 = vmatpush.msra.mxu0 %v291
      %473 = vmatpush.msra.mxu0 %v289
      %474 = vmatpush.msra.mxu0 %v287
      %475 = vmatmul.f32.gmra.mxu0 %v174
      %v476 = vpop.f32.mrf.mxu0
      %v477 = vadd.f32 %v448, %v476
      %478 = vmatmul.f32.gmra.mxu0 %v179
      %v479 = vpop.f32.mrf.mxu0
      %v480 = vadd.f32 %v451, %v479
      %481 = vmatmul.f32.gmra.mxu0 %v184
      %v482 = vpop.f32.mrf.mxu0
      %v483 = vadd.f32 %v454, %v482
      %484 = vmatmul.f32.gmra.mxu0 %v189
      %v485 = vpop.f32.mrf.mxu0
      %v486 = vadd.f32 %v457, %v485
      %487 = vdwg.mxu0
      %488 = vmatpush.msra.mxu0 0.0
      %489 = vmatpush.msra.mxu0 0.0
      %490 = vmatpush.msra.mxu0 0.0
      %491 = vmatpush.msra.mxu0 0.0
      %492 = vmatpush.msra.mxu0 0.0
      %493 = vmatpush.msra.mxu0 0.0
      %494 = vmatpush.msra.mxu0 0.0
      %495 = vmatpush.msra.mxu0 0.0
      %496 = vmatpush.msra.mxu0 %v333
      %497 = vmatpush.msra.mxu0 %v331
      %498 = vmatpush.msra.mxu0 %v329
      %499 = vmatpush.msra.mxu0 %v327
      %500 = vmatpush.msra.mxu0 %v325
      %501 = vmatpush.msra.mxu0 %v323
      %502 = vmatpush.msra.mxu0 %v321
      %503 = vmatpush.msra.mxu0 %v319
      %504 = vmatmul.f32.gmra.mxu0 %v361
      %v505 = vpop.f32.mrf.mxu0
      %v506 = vadd.f32 %v477, %v505
      %507 = vmatmul.f32.gmra.mxu0 %v364
      %v508 = vpop.f32.mrf.mxu0
      %v509 = vadd.f32 %v480, %v508
      %510 = vmatmul.f32.gmra.mxu0 %v367
      %v511 = vpop.f32.mrf.mxu0
      %v512 = vadd.f32 %v483, %v511
      %513 = vmatmul.f32.gmra.mxu0 %v370
      %v514 = vpop.f32.mrf.mxu0
      %v515 = vadd.f32 %v486, %v514
      %516 = vdwg.mxu0
      %517 = vmatpush.msra.mxu0 %v222
      %518 = vmatpush.msra.mxu0 %v220
      %519 = vmatpush.msra.mxu0 %v218
      %520 = vmatpush.msra.mxu0 %v216
      %521 = vmatpush.msra.mxu0 %v214
      %522 = vmatpush.msra.mxu0 %v212
      %523 = vmatpush.msra.mxu0 %v210
      %524 = vmatpush.msra.mxu0 %v208
      %525 = vmatpush.msra.mxu0 %v206
      %526 = vmatpush.msra.mxu0 %v204
      %527 = vmatpush.msra.mxu0 %v202
      %528 = vmatpush.msra.mxu0 %v200
      %529 = vmatpush.msra.mxu0 %v198
      %530 = vmatpush.msra.mxu0 %v196
      %531 = vmatpush.msra.mxu0 %v194
      %532 = vmatpush.msra.mxu0 %v192
      %533 = vmatmul.f32.gmra.mxu0 %v171
      %v534 = vpop.f32.mrf.mxu0
      %v535 = vadd.f32 %v342, %v534
      %536 = vmatmul.f32.gmra.mxu0 %v176
      %v537 = vpop.f32.mrf.mxu0
      %v538 = vadd.f32 %v347, %v537
      %539 = vmatmul.f32.gmra.mxu0 %v181
      %v540 = vpop.f32.mrf.mxu0
      %v541 = vadd.f32 %v352, %v540
      %542 = vmatmul.f32.gmra.mxu0 %v186
      %v543 = vpop.f32.mrf.mxu0
      %v544 = vadd.f32 %v357, %v543
      %545 = vdwg.mxu0
      %546 = vmatpush.msra.mxu0 %v254
      %547 = vmatpush.msra.mxu0 %v252
      %548 = vmatpush.msra.mxu0 %v250
      %549 = vmatpush.msra.mxu0 %v248
      %550 = vmatpush.msra.mxu0 %v246
      %551 = vmatpush.msra.mxu0 %v244
      %552 = vmatpush.msra.mxu0 %v242
      %553 = vmatpush.msra.mxu0 %v240
      %554 = vmatpush.msra.mxu0 %v238
      %555 = vmatpush.msra.mxu0 %v236
      %556 = vmatpush.msra.mxu0 %v234
      %557 = vmatpush.msra.mxu0 %v232
      %558 = vmatpush.msra.mxu0 %v230
      %559 = vmatpush.msra.mxu0 %v228
      %560 = vmatpush.msra.mxu0 %v226
      %561 = vmatpush.msra.mxu0 %v224
      %562 = vmatmul.f32.gmra.mxu0 %v172
      %v563 = vpop.f32.mrf.mxu0
      %v564 = vadd.f32 %v535, %v563
      %565 = vmatmul.f32.gmra.mxu0 %v177
      %v566 = vpop.f32.mrf.mxu0
      %v567 = vadd.f32 %v538, %v566
      %568 = vmatmul.f32.gmra.mxu0 %v182
      %v569 = vpop.f32.mrf.mxu0
      %v570 = vadd.f32 %v541, %v569
      %571 = vmatmul.f32.gmra.mxu0 %v187
      %v572 = vpop.f32.mrf.mxu0
      %v573 = vadd.f32 %v544, %v572
      %574 = vdwg.mxu0
      %575 = vmatpush.msra.mxu0 %v286
      %576 = vmatpush.msra.mxu0 %v284
      %577 = vmatpush.msra.mxu0 %v282
      %578 = vmatpush.msra.mxu0 %v280
      %579 = vmatpush.msra.mxu0 %v278
      %580 = vmatpush.msra.mxu0 %v276
      %581 = vmatpush.msra.mxu0 %v274
      %582 = vmatpush.msra.mxu0 %v272
      %583 = vmatpush.msra.mxu0 %v270
      %584 = vmatpush.msra.mxu0 %v268
      %585 = vmatpush.msra.mxu0 %v266
      %586 = vmatpush.msra.mxu0 %v264
      %587 = vmatpush.msra.mxu0 %v262
      %588 = vmatpush.msra.mxu0 %v260
      %589 = vmatpush.msra.mxu0 %v258
      %590 = vmatpush.msra.mxu0 %v256
      %591 = vmatmul.f32.gmra.mxu0 %v173
      %v592 = vpop.f32.mrf.mxu0
      %v593 = vadd.f32 %v564, %v592
      %594 = vmatmul.f32.gmra.mxu0 %v178
      %v595 = vpop.f32.mrf.mxu0
      %v596 = vadd.f32 %v567, %v595
      %597 = vmatmul.f32.gmra.mxu0 %v183
      %v598 = vpop.f32.mrf.mxu0
      %v599 = vadd.f32 %v570, %v598
      %600 = vmatmul.f32.gmra.mxu0 %v188
      %v601 = vpop.f32.mrf.mxu0
      %v602 = vadd.f32 %v573, %v601
      %603 = vdwg.mxu0
      %604 = vmatpush.msra.mxu0 %v318
      %605 = vmatpush.msra.mxu0 %v316
      %606 = vmatpush.msra.mxu0 %v314
      %607 = vmatpush.msra.mxu0 %v312
      %608 = vmatpush.msra.mxu0 %v310
      %609 = vmatpush.msra.mxu0 %v308
      %610 = vmatpush.msra.mxu0 %v306
      %611 = vmatpush.msra.mxu0 %v304
      %612 = vmatpush.msra.mxu0 %v302
      %613 = vmatpush.msra.mxu0 %v300
      %614 = vmatpush.msra.mxu0 %v298
      %615 = vmatpush.msra.mxu0 %v296
      %616 = vmatpush.msra.mxu0 %v294
      %617 = vmatpush.msra.mxu0 %v292
      %618 = vmatpush.msra.mxu0 %v290
      %619 = vmatpush.msra.mxu0 %v288
      %620 = vmatmul.f32.gmra.mxu0 %v174
      %v621 = vpop.f32.mrf.mxu0
      %v622 = vadd.f32 %v593, %v621
      %623 = vmatmul.f32.gmra.mxu0 %v179
      %v624 = vpop.f32.mrf.mxu0
      %v625 = vadd.f32 %v596, %v624
      %626 = vmatmul.f32.gmra.mxu0 %v184
      %v627 = vpop.f32.mrf.mxu0
      %v628 = vadd.f32 %v599, %v627
      %629 = vmatmul.f32.gmra.mxu0 %v189
      %v630 = vpop.f32.mrf.mxu0
      %v631 = vadd.f32 %v602, %v630
      %632 = vdwg.mxu0
      %633 = vmatpush.msra.mxu0 0.0
      %634 = vmatpush.msra.mxu0 0.0
      %635 = vmatpush.msra.mxu0 0.0
      %636 = vmatpush.msra.mxu0 0.0
      %637 = vmatpush.msra.mxu0 0.0
      %638 = vmatpush.msra.mxu0 0.0
      %639 = vmatpush.msra.mxu0 0.0
      %640 = vmatpush.msra.mxu0 0.0
      %641 = vmatpush.msra.mxu0 %v334
      %642 = vmatpush.msra.mxu0 %v332
      %643 = vmatpush.msra.mxu0 %v330
      %644 = vmatpush.msra.mxu0 %v328
      %645 = vmatpush.msra.mxu0 %v326
      %646 = vmatpush.msra.mxu0 %v324
      %647 = vmatpush.msra.mxu0 %v322
      %648 = vmatpush.msra.mxu0 %v320
      %649 = vmatmul.f32.gmra.mxu0 %v361
      %v650 = vpop.f32.mrf.mxu0
      %v651 = vadd.f32 %v622, %v650
      %652 = vmatmul.f32.gmra.mxu0 %v364
      %v653 = vpop.f32.mrf.mxu0
      %v654 = vadd.f32 %v625, %v653
      %655 = vmatmul.f32.gmra.mxu0 %v367
      %v656 = vpop.f32.mrf.mxu0
      %v657 = vadd.f32 %v628, %v656
      %658 = vmatmul.f32.gmra.mxu0 %v370
      %v659 = vpop.f32.mrf.mxu0
      %v660 = vadd.f32 %v631, %v659
      %661 = vdwg.mxu0
      %662 = vst [vmem:[%s170] sm:$0xff] %v506
      %663 = vst [vmem:[%s170 + $0x8] sm:$0xff] %v651
      %664 = vst [vmem:[%s170 + $0x10] sm:$0xff] %v509
      %665 = vst [vmem:[%s170 + $0x18] sm:$0xff] %v654
      %666 = vst [vmem:[%s170 + $0x20] sm:$0xff] %v512
      %667 = vst [vmem:[%s170 + $0x28] sm:$0xff] %v657
      %668 = vst [vmem:[%s170 + $0x30] sm:$0xff] %v515
      %669 = vst [vmem:[%s170 + $0x38] sm:$0xff] %v660
      %p670 = scmp.lt.s32.totalorder %s14, 1
      %s671 = scalar_select %p670, %s14, 1
      %s672 = smul.addr %s671, 8
      %s673 = smul.addr %s672, 8
      %s674 = scalar_lea.vmem %s3, %s673
      // Predicated region
      $region33: #{conv_block_forward.3} parent=31 // pred_check
        %p675 = pneg %p100
      $region34: #{conv_block_forward.3} parent=31 // pred_check_branch
        %677 = sbr.rel (%p675) target = $region36
      $region35: #{conv_block_forward.3} parent=31 // pred_region
        _
      $region36: #{conv_block_forward.3} parent=31 // pred_fallthru
        _
    $region32: #{conv_block_forward.3} parent=5 // pred_fallthru
      _
    %p678 = scmp.le.s32.totalorder 2, %s9
    // Predicated region
    $region37: #{conv_block_forward.3} parent=5 // pred_check
      %p679 = pneg %p678
    $region38: #{conv_block_forward.3} parent=5 // pred_check_branch
      %681 = sbr.rel (%p679) target = $region40
    $region39: #{conv_block_forward.3} parent=5 // pred_region
      %s682 = ssub.s32 %s9, 2
      // Predicated region
      $region41: #{conv_block_forward.3} parent=39 // pred_check
        %p683 = pneg %p106
      $region42: #{conv_block_forward.3} parent=39 // pred_check_branch
        %685 = sbr.rel (%p683) target = $region44
      $region43: #{conv_block_forward.3} parent=39 // pred_region
        %p686 = scmp.lt.s32.totalorder %s15, 1
        %s687 = scalar_select %p686, %s15, 1
        %s688 = smul.addr %s687, 8
        %s689 = smul.addr %s688, 8
        %s690 = scalar_lea.vmem %s3, %s689
      $region44: #{conv_block_forward.3} parent=39 // pred_fallthru
        _
    $region40: #{conv_block_forward.3} parent=5 // pred_fallthru
      _
  $region6: #{conv_block_forward.3} parent=0 // loop_footer
    %s13 = sadd.s32 1, %s9
  $region7: #{conv_block_forward.3} parent=0 // loop_footer_branch
    %8 = sbr.rel target = $region3
  $region8: #{conv_block_forward.3} parent=0 // loop_exit
    _

</llo_original>
